<compile_context>
chip_gen: v7x
topology: tpu7x:2x2x1
jax: 0.10.0
libtpu: 0.0.40
codegen_flags: <defaults>
</compile_context>

<pallas_src>
import functools

import numpy as np
import jax
import jax.numpy as jnp
from jax import lax
from jax.experimental import pallas as pl
from jax.experimental.pallas import tpu as pltpu


def _round_up(n, m):
    return ((n + m - 1) // m) * m


# ---------------------------------------------------------------------------
# Fused Pallas kernel: conv_out + qkv_conv matmul -> attention -> 1x1 proj
# ---------------------------------------------------------------------------
def _fused_kernel(xcol_ref, w_ref, b_ref, w1_ref, b1_ref, o_ref, y_scr, *,
                  co1, Nh, dkh_p, dvh, dvh_p, q_off, k_off, v_off, scale):
    # --- fused 3x3 conv_out + qkv_conv: one im2col matmul ------------------
    # w_ref: (tot, C*9), xcol_ref: (C*9, HW) -> y: (tot, HW); bias broadcast
    # over the HW lane dim. Padded (all-zero) rows stay zero.
    y = jnp.dot(w_ref[...], xcol_ref[...], preferred_element_type=jnp.float32)
    y_scr[...] = y + b_ref[...]

    # --- attention: all Nh heads in this single grid step (loop unrolled) --
    heads = []
    for h in range(Nh):
        # 8-row aligned slices; the zero-padded rows contribute 0 to the
        # contractions below, so results are identical to the unpadded math.
        qh = y_scr[q_off + h * dkh_p:q_off + (h + 1) * dkh_p, :] * scale  # (dkh_p, HW)
        kh = y_scr[k_off + h * dkh_p:k_off + (h + 1) * dkh_p, :]          # (dkh_p, HW)
        vh = y_scr[v_off + h * dvh_p:v_off + (h + 1) * dvh_p, :]          # (dvh_p, HW)

        # logits[i, j] = sum_d q[d, i] * k[d, j]   -> (HW, HW)
        logits = lax.dot_general(qh, kh, (((0,), (0,)), ((), ())),
                                 preferred_element_type=jnp.float32)
        m = jnp.max(logits, axis=-1, keepdims=True)
        p = jnp.exp(logits - m)
        denom = jnp.sum(p, axis=-1, keepdims=True)
        wgt = p * pl.reciprocal(denom, approx=True)

        # lane-dense per-head output: out[d, i] = sum_j v[d, j] * wgt[i, j]
        oh = lax.dot_general(vh, wgt, (((1,), (1,)), ((), ())),
                             preferred_element_type=jnp.float32)          # (dvh_p, HW)
        heads.append(oh[0:dvh, :])            # drop zero-padded v rows

    attn = jnp.concatenate(heads, axis=0)     # (Nh*dvh, HW) = (dv, HW), head-major

    # --- fused 1x1 attn_out projection --------------------------------------
    attn = jnp.dot(w1_ref[...], attn, preferred_element_type=jnp.float32) + b1_ref[...]

    # --- concat(conv_out, attn_out) along channels, one (planes, HW) store --
    o_ref[...] = jnp.concatenate([y_scr[0:co1, :], attn], axis=0).astype(o_ref.dtype)


# ---------------------------------------------------------------------------
# Wrapper (mirrors SpatialAttentionModule.forward)
# ---------------------------------------------------------------------------
def spatial_attention_forward(x, params, planes, Nh):
    dk = 2 * planes
    dv = (planes // 20) * 4
    dkh, dvh = dk // Nh, dv // Nh
    if dvh != 1:
        # TODO(synk): torch's reshape (B,Nh,HW,dvh)->(B,Nh,dvh,H,W) interleaves HW
        # and dvh for dvh > 1; only the dvh == 1 case (planes == 20) is implemented.
        raise NotImplementedError("dvh > 1 not supported by this kernel")

    B, C, H, W = x.shape
    HW = H * W
    co1 = planes - dv          # conv_out channels
    co2 = 2 * dk + dv          # qkv channels

    # --- padded, head-aligned fused weight layout ---------------------------
    co1_p = _round_up(co1, 8)
    dkh_p = _round_up(dkh, 8)
    dvh_p = _round_up(dvh, 8)
    q_off = co1_p
    k_off = q_off + Nh * dkh_p
    v_off = k_off + Nh * dkh_p
    tot = v_off + Nh * dvh_p

    w_conv = params["conv_w"].reshape(co1, C * 9)
    w_qkv = params["qkv_w"].reshape(co2, C * 9)
    b_conv = params["conv_b"]
    b_qkv = params["qkv_b"]

    w_pad = jnp.zeros((tot, C * 9), jnp.float32).at[:co1].set(w_conv)
    b_pad = jnp.zeros((tot,), jnp.float32).at[:co1].set(b_conv)
    for h in range(Nh):
        qs, ks_, vs = q_off + h * dkh_p, k_off + h * dkh_p, v_off + h * dvh_p
        w_pad = w_pad.at[qs:qs + dkh].set(w_qkv[h * dkh:(h + 1) * dkh])
        b_pad = b_pad.at[qs:qs + dkh].set(b_qkv[h * dkh:(h + 1) * dkh])
        w_pad = w_pad.at[ks_:ks_ + dkh].set(w_qkv[dk + h * dkh:dk + (h + 1) * dkh])
        b_pad = b_pad.at[ks_:ks_ + dkh].set(b_qkv[dk + h * dkh:dk + (h + 1) * dkh])
        w_pad = w_pad.at[vs:vs + dvh].set(w_qkv[2 * dk + h * dvh:2 * dk + (h + 1) * dvh])
        b_pad = b_pad.at[vs:vs + dvh].set(b_qkv[2 * dk + h * dvh:2 * dk + (h + 1) * dvh])
    b_pad = b_pad.reshape(tot, 1)

    w1 = params["attn_w"].reshape(dv, dv)
    b1 = params["attn_b"].reshape(dv, 1)

    # --- minimal im2col: pad + 9 shifted slices + reshape (no transposes) ---
    # row index = c*9 + (dy*3 + dx), matching torch's (O, I, kh, kw) reshape.
    xp = jnp.pad(x, ((0, 0), (0, 0), (1, 1), (1, 1)))
    taps = [xp[:, :, dy:dy + H, dx:dx + W] for dy in range(3) for dx in range(3)]
    xcol = jnp.stack(taps, axis=2).reshape(B, C * 9, HW)

    scale = float(dkh) ** (-0.5)
    kernel = functools.partial(
        _fused_kernel, co1=co1, Nh=Nh, dkh_p=dkh_p, dvh=dvh, dvh_p=dvh_p,
        q_off=q_off, k_off=k_off, v_off=v_off, scale=scale)

    out = pl.pallas_call(
        kernel,
        out_shape=jax.ShapeDtypeStruct((B, planes, HW), jnp.float32),
        grid=(B,),
        in_specs=[
            pl.BlockSpec((None, C * 9, HW), lambda b: (b, 0, 0)),
            pl.BlockSpec((tot, C * 9), lambda b: (0, 0)),
            pl.BlockSpec((tot, 1), lambda b: (0, 0)),
            pl.BlockSpec((dv, dv), lambda b: (0, 0)),
            pl.BlockSpec((dv, 1), lambda b: (0, 0)),
        ],
        out_specs=pl.BlockSpec((None, planes, HW), lambda b: (b, 0, 0)),
        scratch_shapes=[pltpu.VMEM((tot, HW), jnp.float32)],
        compiler_params=pltpu.CompilerParams(dimension_semantics=("parallel",)),
    )(xcol, w_pad, b_pad, w1, b1)

    return out.reshape(B, planes, H, W)


# ---------------------------------------------------------------------------
# Pure-JAX reference (same semantics) for a sanity check
# ---------------------------------------------------------------------------
def reference_forward(x, params, planes, Nh):
    dk = 2 * planes
    dv = (planes // 20) * 4
    dkh, dvh = dk // Nh, dv // Nh
    B, C, H, W = x.shape
    HW = H * W
    dn = ("NCHW", "OIHW", "NCHW")

    conv_out = lax.conv_general_dilated(
        x, params["conv_w"], (1, 1), ((1, 1), (1, 1)), dimension_numbers=dn
    ) + params["conv_b"][None, :, None, None]
    qkv = lax.conv_general_dilated(
        x, params["qkv_w"], (1, 1), ((1, 1), (1, 1)), dimension_numbers=dn
    ) + params["qkv_b"][None, :, None, None]

    q, k, v = qkv[:, :dk], qkv[:, dk:2 * dk], qkv[:, 2 * dk:]
    flat_q = q.reshape(B, Nh, dkh, HW) * (dkh ** -0.5)
    flat_k = k.reshape(B, Nh, dkh, HW)
    flat_v = v.reshape(B, Nh, dvh, HW)

    logits = jnp.einsum("bndi,bndj->bnij", flat_q, flat_k)
    weights = jax.nn.softmax(logits, axis=-1)
    attn = jnp.einsum("bnij,bndj->bnid", weights, flat_v)        # (B, Nh, HW, dvh)
    attn = attn.reshape(B, Nh, dvh, H, W).reshape(B, dv, H, W)

    attn = lax.conv_general_dilated(
        attn, params["attn_w"], (1, 1), ((0, 0), (0, 0)), dimension_numbers=dn
    ) + params["attn_b"][None, :, None, None]

    return jnp.concatenate([conv_out, attn], axis=1)


# ---------------------------------------------------------------------------
# Main
# ---------------------------------------------------------------------------
if __name__ == "__main__":
    planes, Nh = 20, 4           # dk = 40, dv = 4, dkh = 10, dvh = 1
    B, H, W = 2, 8, 8
    dk = 2 * planes
    dv = (planes // 20) * 4

    key = jax.random.PRNGKey(0)
    ks = jax.random.split(key, 7)
    params = {
        "conv_w": 0.1 * jax.random.normal(ks[0], (planes - dv, planes, 3, 3), jnp.float32),
        "conv_b": 0.1 * jax.random.normal(ks[1], (planes - dv,), jnp.float32),
        "qkv_w": 0.1 * jax.random.normal(ks[2], (2 * dk + dv, planes, 3, 3), jnp.float32),
        "qkv_b": 0.1 * jax.random.normal(ks[3], (2 * dk + dv,), jnp.float32),
        "attn_w": 0.1 * jax.random.normal(ks[4], (dv, dv, 1, 1), jnp.float32),
        "attn_b": 0.1 * jax.random.normal(ks[5], (dv,), jnp.float32),
    }
    x = jax.random.normal(ks[6], (B, planes, H, W), jnp.float32)

    fwd = jax.jit(functools.partial(spatial_attention_forward, planes=planes, Nh=Nh))
    out = jax.block_until_ready(fwd(x, params))
    assert out.shape == (B, planes, H, W), out.shape

    ref = jax.block_until_ready(reference_forward(x, params, planes, Nh))
    max_err = float(np.max(np.abs(np.asarray(out) - np.asarray(ref))))
    # tolerance leaves headroom for the approx-reciprocal softmax normalization
    assert np.allclose(np.asarray(out), np.asarray(ref), atol=5e-3, rtol=5e-3), max_err

    print("KERNEL_OK")
</pallas_src>

<mosaic_0001>
module attributes {stable_mosaic.version = 11 : i64} {
  func.func @_fused_kernel(%arg0: i32, %arg1: memref<1x180x64xf32, #tpu.memory_space<vmem>>, %arg2: memref<176x180xf32, #tpu.memory_space<vmem>>, %arg3: memref<176x1xf32, #tpu.memory_space<vmem>>, %arg4: memref<4x4xf32, #tpu.memory_space<vmem>>, %arg5: memref<4x1xf32, #tpu.memory_space<vmem>>, %arg6: memref<1x20x64xf32, #tpu.memory_space<vmem>>, %arg7: memref<176x64xf32, #tpu.memory_space<vmem>>) attributes {dimension_semantics = [#tpu.dimension_semantics<parallel>], iteration_bounds = array<i64: 2>, scalar_prefetch = 0 : i64, scratch_operands = 1 : i64, tpu.core_type = #tpu.core_type<tc>, window_params = [{transform_indices = @transform_0, window_bounds = array<i64: 1, 180, 64>}, {pipeline_mode = #tpu.pipeline_mode<synchronous>, transform_indices = @transform_1, window_bounds = array<i64: 176, 180>}, {pipeline_mode = #tpu.pipeline_mode<synchronous>, transform_indices = @transform_2, window_bounds = array<i64: 176, 1>}, {pipeline_mode = #tpu.pipeline_mode<synchronous>, transform_indices = @transform_3, window_bounds = array<i64: 4, 4>}, {pipeline_mode = #tpu.pipeline_mode<synchronous>, transform_indices = @transform_4, window_bounds = array<i64: 4, 1>}, {transform_indices = @transform_5, window_bounds = array<i64: 1, 20, 64>}]} {
    %c0 = arith.constant 0 : index
    %c0_0 = arith.constant 0 : index
    %0 = vector.load %arg2[%c0, %c0_0] : memref<176x180xf32, #tpu.memory_space<vmem>>, vector<176x180xf32>
    %c0_1 = arith.constant 0 : index
    %c0_2 = arith.constant 0 : index
    %c0_3 = arith.constant 0 : index
    %1 = vector.load %arg1[%c0_1, %c0_2, %c0_3] : memref<1x180x64xf32, #tpu.memory_space<vmem>>, vector<1x180x64xf32>
    %2 = vector.shape_cast %1 : vector<1x180x64xf32> to vector<180x64xf32>
    %cst = arith.constant dense<0.000000e+00> : vector<176x64xf32>
    %3 = tpu.matmul %0, %2, %cst {dimension_numbers = #tpu.dot_dimension_numbers<[1], [0], [0], [1], [0, 0, 1, 1], [], []>} : vector<176x180xf32>, vector<180x64xf32>, vector<176x64xf32> -> vector<176x64xf32>
    %c0_4 = arith.constant 0 : index
    %c0_5 = arith.constant 0 : index
    %4 = vector.load %arg3[%c0_4, %c0_5] : memref<176x1xf32, #tpu.memory_space<vmem>>, vector<176x1xf32>
    %5 = vector.broadcast %4 : vector<176x1xf32> to vector<176x64xf32>
    %6 = arith.addf %3, %5 : vector<176x64xf32>
    %c0_6 = arith.constant 0 : index
    %c0_7 = arith.constant 0 : index
    %7 = vector.load %arg7[%c0_6, %c0_7] : memref<176x64xf32, #tpu.memory_space<vmem>>, vector<176x64xf32>
    tpu.vector_store %arg7[%c0_6, %c0_7], %6 {strides = array<i32>} : memref<176x64xf32, #tpu.memory_space<vmem>>, vector<176x64xf32>,
    %c16 = arith.constant 16 : index
    %c0_8 = arith.constant 0 : index
    %8 = vector.load %arg7[%c16, %c0_8] : memref<176x64xf32, #tpu.memory_space<vmem>>, vector<16x64xf32>
    %cst_9 = arith.constant 0.316227764 : f32
    %9 = vector.broadcast %cst_9 : f32 to vector<16x64xf32>
    %10 = arith.mulf %8, %9 : vector<16x64xf32>
    %c80 = arith.constant 80 : index
    %c0_10 = arith.constant 0 : index
    %11 = vector.load %arg7[%c80, %c0_10] : memref<176x64xf32, #tpu.memory_space<vmem>>, vector<16x64xf32>
    %c144 = arith.constant 144 : index
    %c0_11 = arith.constant 0 : index
    %12 = vector.load %arg7[%c144, %c0_11] : memref<176x64xf32, #tpu.memory_space<vmem>>, vector<8x64xf32>
    %cst_12 = arith.constant dense<0.000000e+00> : vector<64x64xf32>
    %13 = tpu.matmul %10, %11, %cst_12 {dimension_numbers = #tpu.dot_dimension_numbers<[0], [0], [1], [1], [0, 1, 1, 1], [], []>} : vector<16x64xf32>, vector<16x64xf32>, vector<64x64xf32> -> vector<64x64xf32>
    %cst_13 = arith.constant dense<0xFF800000> : vector<64xf32>
    %14 = vector.multi_reduction <maximumf>, %13, %cst_13 [1] : vector<64x64xf32> to vector<64xf32>
    %15 = vector.shape_cast %14 : vector<64xf32> to vector<64x1xf32>
    %16 = vector.broadcast %15 : vector<64x1xf32> to vector<64x64xf32>
    %17 = arith.subf %13, %16 : vector<64x64xf32>
    %18 = math.exp %17 : vector<64x64xf32>
    %cst_14 = arith.constant dense<0.000000e+00> : vector<64xf32>
    %19 = vector.multi_reduction <add>, %18, %cst_14 [1] : vector<64x64xf32> to vector<64xf32>
    %20 = vector.shape_cast %19 : vector<64xf32> to vector<64x1xf32>
    %21 = tpu.reciprocal %20 {approx = true} : vector<64x1xf32> -> vector<64x1xf32>
    %22 = vector.broadcast %21 : vector<64x1xf32> to vector<64x64xf32>
    %23 = arith.mulf %18, %22 : vector<64x64xf32>
    %cst_15 = arith.constant dense<0.000000e+00> : vector<8x64xf32>
    %24 = tpu.matmul %12, %23, %cst_15 {dimension_numbers = #tpu.dot_dimension_numbers<[1], [1], [0], [0], [0, 0, 1, 0], [], []>} : vector<8x64xf32>, vector<64x64xf32>, vector<8x64xf32> -> vector<8x64xf32>
    %25 = vector.extract_strided_slice %24 {offsets = [0, 0], sizes = [1, 64], strides = [1, 1]} : vector<8x64xf32> to vector<1x64xf32>
    %c32 = arith.constant 32 : index
    %c0_16 = arith.constant 0 : index
    %26 = vector.load %arg7[%c32, %c0_16] : memref<176x64xf32, #tpu.memory_space<vmem>>, vector<16x64xf32>
    %cst_17 = arith.constant 0.316227764 : f32
    %27 = vector.broadcast %cst_17 : f32 to vector<16x64xf32>
    %28 = arith.mulf %26, %27 : vector<16x64xf32>
    %c96 = arith.constant 96 : index
    %c0_18 = arith.constant 0 : index
    %29 = vector.load %arg7[%c96, %c0_18] : memref<176x64xf32, #tpu.memory_space<vmem>>, vector<16x64xf32>
    %c152 = arith.constant 152 : index
    %c0_19 = arith.constant 0 : index
    %30 = vector.load %arg7[%c152, %c0_19] : memref<176x64xf32, #tpu.memory_space<vmem>>, vector<8x64xf32>
    %cst_20 = arith.constant dense<0.000000e+00> : vector<64x64xf32>
    %31 = tpu.matmul %28, %29, %cst_20 {dimension_numbers = #tpu.dot_dimension_numbers<[0], [0], [1], [1], [0, 1, 1, 1], [], []>} : vector<16x64xf32>, vector<16x64xf32>, vector<64x64xf32> -> vector<64x64xf32>
    %cst_21 = arith.constant dense<0xFF800000> : vector<64xf32>
    %32 = vector.multi_reduction <maximumf>, %31, %cst_21 [1] : vector<64x64xf32> to vector<64xf32>
    %33 = vector.shape_cast %32 : vector<64xf32> to vector<64x1xf32>
    %34 = vector.broadcast %33 : vector<64x1xf32> to vector<64x64xf32>
    %35 = arith.subf %31, %34 : vector<64x64xf32>
    %36 = math.exp %35 : vector<64x64xf32>
    %cst_22 = arith.constant dense<0.000000e+00> : vector<64xf32>
    %37 = vector.multi_reduction <add>, %36, %cst_22 [1] : vector<64x64xf32> to vector<64xf32>
    %38 = vector.shape_cast %37 : vector<64xf32> to vector<64x1xf32>
    %39 = tpu.reciprocal %38 {approx = true} : vector<64x1xf32> -> vector<64x1xf32>
    %40 = vector.broadcast %39 : vector<64x1xf32> to vector<64x64xf32>
    %41 = arith.mulf %36, %40 : vector<64x64xf32>
    %cst_23 = arith.constant dense<0.000000e+00> : vector<8x64xf32>
    %42 = tpu.matmul %30, %41, %cst_23 {dimension_numbers = #tpu.dot_dimension_numbers<[1], [1], [0], [0], [0, 0, 1, 0], [], []>} : vector<8x64xf32>, vector<64x64xf32>, vector<8x64xf32> -> vector<8x64xf32>
    %43 = vector.extract_strided_slice %42 {offsets = [0, 0], sizes = [1, 64], strides = [1, 1]} : vector<8x64xf32> to vector<1x64xf32>
    %c48 = arith.constant 48 : index
    %c0_24 = arith.constant 0 : index
    %44 = vector.load %arg7[%c48, %c0_24] : memref<176x64xf32, #tpu.memory_space<vmem>>, vector<16x64xf32>
    %cst_25 = arith.constant 0.316227764 : f32
    %45 = vector.broadcast %cst_25 : f32 to vector<16x64xf32>
    %46 = arith.mulf %44, %45 : vector<16x64xf32>
    %c112 = arith.constant 112 : index
    %c0_26 = arith.constant 0 : index
    %47 = vector.load %arg7[%c112, %c0_26] : memref<176x64xf32, #tpu.memory_space<vmem>>, vector<16x64xf32>
    %c160 = arith.constant 160 : index
    %c0_27 = arith.constant 0 : index
    %48 = vector.load %arg7[%c160, %c0_27] : memref<176x64xf32, #tpu.memory_space<vmem>>, vector<8x64xf32>
    %cst_28 = arith.constant dense<0.000000e+00> : vector<64x64xf32>
    %49 = tpu.matmul %46, %47, %cst_28 {dimension_numbers = #tpu.dot_dimension_numbers<[0], [0], [1], [1], [0, 1, 1, 1], [], []>} : vector<16x64xf32>, vector<16x64xf32>, vector<64x64xf32> -> vector<64x64xf32>
    %cst_29 = arith.constant dense<0xFF800000> : vector<64xf32>
    %50 = vector.multi_reduction <maximumf>, %49, %cst_29 [1] : vector<64x64xf32> to vector<64xf32>
    %51 = vector.shape_cast %50 : vector<64xf32> to vector<64x1xf32>
    %52 = vector.broadcast %51 : vector<64x1xf32> to vector<64x64xf32>
    %53 = arith.subf %49, %52 : vector<64x64xf32>
    %54 = math.exp %53 : vector<64x64xf32>
    %cst_30 = arith.constant dense<0.000000e+00> : vector<64xf32>
    %55 = vector.multi_reduction <add>, %54, %cst_30 [1] : vector<64x64xf32> to vector<64xf32>
    %56 = vector.shape_cast %55 : vector<64xf32> to vector<64x1xf32>
    %57 = tpu.reciprocal %56 {approx = true} : vector<64x1xf32> -> vector<64x1xf32>
    %58 = vector.broadcast %57 : vector<64x1xf32> to vector<64x64xf32>
    %59 = arith.mulf %54, %58 : vector<64x64xf32>
    %cst_31 = arith.constant dense<0.000000e+00> : vector<8x64xf32>
    %60 = tpu.matmul %48, %59, %cst_31 {dimension_numbers = #tpu.dot_dimension_numbers<[1], [1], [0], [0], [0, 0, 1, 0], [], []>} : vector<8x64xf32>, vector<64x64xf32>, vector<8x64xf32> -> vector<8x64xf32>
    %61 = vector.extract_strided_slice %60 {offsets = [0, 0], sizes = [1, 64], strides = [1, 1]} : vector<8x64xf32> to vector<1x64xf32>
    %c64 = arith.constant 64 : index
    %c0_32 = arith.constant 0 : index
    %62 = vector.load %arg7[%c64, %c0_32] : memref<176x64xf32, #tpu.memory_space<vmem>>, vector<16x64xf32>
    %cst_33 = arith.constant 0.316227764 : f32
    %63 = vector.broadcast %cst_33 : f32 to vector<16x64xf32>
    %64 = arith.mulf %62, %63 : vector<16x64xf32>
    %c128 = arith.constant 128 : index
    %c0_34 = arith.constant 0 : index
    %65 = vector.load %arg7[%c128, %c0_34] : memref<176x64xf32, #tpu.memory_space<vmem>>, vector<16x64xf32>
    %c168 = arith.constant 168 : index
    %c0_35 = arith.constant 0 : index
    %66 = vector.load %arg7[%c168, %c0_35] : memref<176x64xf32, #tpu.memory_space<vmem>>, vector<8x64xf32>
    %cst_36 = arith.constant dense<0.000000e+00> : vector<64x64xf32>
    %67 = tpu.matmul %64, %65, %cst_36 {dimension_numbers = #tpu.dot_dimension_numbers<[0], [0], [1], [1], [0, 1, 1, 1], [], []>} : vector<16x64xf32>, vector<16x64xf32>, vector<64x64xf32> -> vector<64x64xf32>
    %cst_37 = arith.constant dense<0xFF800000> : vector<64xf32>
    %68 = vector.multi_reduction <maximumf>, %67, %cst_37 [1] : vector<64x64xf32> to vector<64xf32>
    %69 = vector.shape_cast %68 : vector<64xf32> to vector<64x1xf32>
    %70 = vector.broadcast %69 : vector<64x1xf32> to vector<64x64xf32>
    %71 = arith.subf %67, %70 : vector<64x64xf32>
    %72 = math.exp %71 : vector<64x64xf32>
    %cst_38 = arith.constant dense<0.000000e+00> : vector<64xf32>
    %73 = vector.multi_reduction <add>, %72, %cst_38 [1] : vector<64x64xf32> to vector<64xf32>
    %74 = vector.shape_cast %73 : vector<64xf32> to vector<64x1xf32>
    %75 = tpu.reciprocal %74 {approx = true} : vector<64x1xf32> -> vector<64x1xf32>
    %76 = vector.broadcast %75 : vector<64x1xf32> to vector<64x64xf32>
    %77 = arith.mulf %72, %76 : vector<64x64xf32>
    %cst_39 = arith.constant dense<0.000000e+00> : vector<8x64xf32>
    %78 = tpu.matmul %66, %77, %cst_39 {dimension_numbers = #tpu.dot_dimension_numbers<[1], [1], [0], [0], [0, 0, 1, 0], [], []>} : vector<8x64xf32>, vector<64x64xf32>, vector<8x64xf32> -> vector<8x64xf32>
    %79 = vector.extract_strided_slice %78 {offsets = [0, 0], sizes = [1, 64], strides = [1, 1]} : vector<8x64xf32> to vector<1x64xf32>
    %80 = tpu.concatenate %25, %43, %61, %79 in 0 : vector<1x64xf32>, vector<1x64xf32>, vector<1x64xf32>, vector<1x64xf32> -> vector<4x64xf32>
    %c0_40 = arith.constant 0 : index
    %c0_41 = arith.constant 0 : index
    %81 = vector.load %arg4[%c0_40, %c0_41] : memref<4x4xf32, #tpu.memory_space<vmem>>, vector<4x4xf32>
    %cst_42 = arith.constant dense<0.000000e+00> : vector<4x64xf32>
    %82 = tpu.matmul %81, %80, %cst_42 {dimension_numbers = #tpu.dot_dimension_numbers<[1], [0], [0], [1], [0, 0, 1, 1], [], []>} : vector<4x4xf32>, vector<4x64xf32>, vector<4x64xf32> -> vector<4x64xf32>
    %c0_43 = arith.constant 0 : index
    %c0_44 = arith.constant 0 : index
    %83 = vector.load %arg5[%c0_43, %c0_44] : memref<4x1xf32, #tpu.memory_space<vmem>>, vector<4x1xf32>
    %84 = vector.broadcast %83 : vector<4x1xf32> to vector<4x64xf32>
    %85 = arith.addf %82, %84 : vector<4x64xf32>
    %c0_45 = arith.constant 0 : index
    %c0_46 = arith.constant 0 : index
    %86 = vector.load %arg7[%c0_45, %c0_46] : memref<176x64xf32, #tpu.memory_space<vmem>>, vector<16x64xf32>
    %87 = tpu.concatenate %86, %85 in 0 : vector<16x64xf32>, vector<4x64xf32> -> vector<20x64xf32>
    %c0_47 = arith.constant 0 : index
    %c0_48 = arith.constant 0 : index
    %c0_49 = arith.constant 0 : index
    %88 = vector.load %arg6[%c0_47, %c0_48, %c0_49] : memref<1x20x64xf32, #tpu.memory_space<vmem>>, vector<1x20x64xf32>
    %89 = vector.shape_cast %88 : vector<1x20x64xf32> to vector<20x64xf32>
    %90 = vector.shape_cast %87 : vector<20x64xf32> to vector<1x20x64xf32>
    tpu.vector_store %arg6[%c0_47, %c0_48, %c0_49], %90 {strides = array<i32>} : memref<1x20x64xf32, #tpu.memory_space<vmem>>, vector<1x20x64xf32>,
    return
  }
  func.func @transform_0(%arg0: i32) -> (i32, i32, i32) {
    %c0_i32 = arith.constant 0 : i32
    %c0_i32_0 = arith.constant 0 : i32
    %c0_i32_1 = arith.constant 0 : i32
    return %arg0, %c0_i32, %c0_i32_0 : i32, i32, i32
  }
  func.func @transform_1(%arg0: i32) -> (i32, i32) {
    %c0_i32 = arith.constant 0 : i32
    %c0_i32_0 = arith.constant 0 : i32
    %c0_i32_1 = arith.constant 0 : i32
    return %c0_i32, %c0_i32_0 : i32, i32
  }
  func.func @transform_2(%arg0: i32) -> (i32, i32) {
    %c0_i32 = arith.constant 0 : i32
    %c0_i32_0 = arith.constant 0 : i32
    %c0_i32_1 = arith.constant 0 : i32
    return %c0_i32, %c0_i32_0 : i32, i32
  }
  func.func @transform_3(%arg0: i32) -> (i32, i32) {
    %c0_i32 = arith.constant 0 : i32
    %c0_i32_0 = arith.constant 0 : i32
    %c0_i32_1 = arith.constant 0 : i32
    return %c0_i32, %c0_i32_0 : i32, i32
  }
  func.func @transform_4(%arg0: i32) -> (i32, i32) {
    %c0_i32 = arith.constant 0 : i32
    %c0_i32_0 = arith.constant 0 : i32
    %c0_i32_1 = arith.constant 0 : i32
    return %c0_i32, %c0_i32_0 : i32, i32
  }
  func.func @transform_5(%arg0: i32) -> (i32, i32, i32) {
    %c0_i32 = arith.constant 0 : i32
    %c0_i32_0 = arith.constant 0 : i32
    %c0_i32_1 = arith.constant 0 : i32
    return %arg0, %c0_i32, %c0_i32_0 : i32, i32, i32
  }
}

</mosaic_0001>

<llo_original>
// kernel: spatial_attention_forward.1
$region0: #{spatial_attention_forward.1}
  #allocation0 [shape = 'u32[]', space=smem, size = 0x4, offset = 0x4, fixed_abs, tag = 'smem constant byte address 0x4 - core index']
  #allocation1 [shape = 'u32[144,128]{1,0:T(1,128)}', space=vmem, size = 0x12000, scoped, tag = 'internal scratch']
  #allocation2 [shape = 'f32[176,64]{1,0:T(8,128)}', space=vmem, size = 0x16000, scoped, tag = 'scratch operand']
  %s0 = inlined_call_operand.vmem [shape: f32[2,180,64], index: 0, kind: input, shape index: {}]
  %s1 = inlined_call_operand.vmem [shape: f32[176,180], index: 1, kind: input, shape index: {}]
  %s2 = inlined_call_operand.vmem [shape: f32[176,1], index: 2, kind: input, shape index: {}]
  %s3 = inlined_call_operand.vmem [shape: f32[4,4], index: 3, kind: input, shape index: {}]
  %s4 = inlined_call_operand.vmem [shape: f32[4,1], index: 4, kind: input, shape index: {}]
  %s5 = inlined_call_operand.vmem [shape: f32[2,20,64], index: 5, kind: output, shape index: {}]
  %s6 = sld [smem:[#allocation0]]
  $region53: #{spatial_attention_forward.1} parent=0
    _
  %s8 = ssub.s32 1, %s6
  %s9 = scalar_select 0, %s8, %s6
  loop: start=0, step=1, limit=4
  $region2: #{spatial_attention_forward.1} parent=0 // loop_pre_header
    _
  $region3: #{spatial_attention_forward.1} parent=0 // loop_header
    %s11 = sphi 0, %s15
    %p12 = scmp.ge.s32.totalorder %s11, 4
    %s21 = sphi 0, %s23
    %s24 = sphi 0, %s21
    %s25 = sphi 0, %s24
    %s41 = sphi 0, %s25
    %s45 = sphi 0, %s45
    %s47 = sphi 0, %s45
    %s48 = sphi 0, %s47
    %s62 = sphi 0, %s48
    %s66 = sphi 0, %s66
    %s68 = sphi 0, %s66
    %s69 = sphi 0, %s68
    %s83 = sphi 0, %s69
    %s87 = sphi 0, %s87
    %s89 = sphi 0, %s87
    %s90 = sphi 0, %s89
    %s104 = sphi 0, %s90
    %s108 = sphi 0, %s108
    %s110 = sphi 0, %s108
    %s111 = sphi 0, %s110
    %s125 = sphi 0, %s111
    %s131 = sphi 0, %s133
    %s134 = sphi 0, %s131
    %s135 = sphi 0, %s134
    %s151 = sphi 0, %s135
  $region4: #{spatial_attention_forward.1} parent=0 // loop_header_branch
    %14 = sbr.rel (%p12) target = $region8
  $region5: #{spatial_attention_forward.1} parent=0 // loop_body
    %s16 = ssub.s32 %s11, 1
    %s17 = ssub.s32 %s11, 2
    %s18 = sadd.s32 %s11, 1
    %s19 = ssub.s32 %s11, %s18
    %p20 = scmp.eq.s32.totalorder %s19, 0
    %s22 = sadd.s32 %s21, 1
    %s23 = scalar_select %p20, %s21, %s22
    %p26 = pneg %p20
    %p27 = scmp.eq.s32.totalorder %s11, 1
    %p28 = por %p26, %p27
    %p29 = scmp.ne.s32.totalorder %s21, %s24
    %p30 = scmp.eq.s32.totalorder %s11, 0
    %p31 = por %p29, %p30
    %p32 = scmp.ne.s32.totalorder %s21, %s24
    %p33 = scmp.eq.s32.totalorder %s16, 1
    %p34 = por %p32, %p33
    %p35 = scmp.ne.s32.totalorder %s24, %s25
    %p36 = scmp.eq.s32.totalorder %s16, 0
    %p37 = por %p35, %p36
    %p38 = scmp.ne.s32.totalorder %s24, %s25
    %p39 = scmp.eq.s32.totalorder %s17, 1
    %p40 = por %p38, %p39
    %p42 = scmp.ne.s32.totalorder %s25, %s41
    %p43 = scmp.eq.s32.totalorder %s17, 0
    %p44 = por %p42, %p43
    %s46 = sadd.s32 %s45, 1
    %p49 = scmp.eq.s32.totalorder %s11, 1
    %p50 = scmp.ne.s32.totalorder %s45, %s47
    %p51 = scmp.eq.s32.totalorder %s11, 0
    %p52 = por %p50, %p51
    %p53 = scmp.ne.s32.totalorder %s45, %s47
    %p54 = scmp.eq.s32.totalorder %s16, 1
    %p55 = por %p53, %p54
    %p56 = scmp.ne.s32.totalorder %s47, %s48
    %p57 = scmp.eq.s32.totalorder %s16, 0
    %p58 = por %p56, %p57
    %p59 = scmp.ne.s32.totalorder %s47, %s48
    %p60 = scmp.eq.s32.totalorder %s17, 1
    %p61 = por %p59, %p60
    %p63 = scmp.ne.s32.totalorder %s48, %s62
    %p64 = scmp.eq.s32.totalorder %s17, 0
    %p65 = por %p63, %p64
    %s67 = sadd.s32 %s66, 1
    %p70 = scmp.eq.s32.totalorder %s11, 1
    %p71 = scmp.ne.s32.totalorder %s66, %s68
    %p72 = scmp.eq.s32.totalorder %s11, 0
    %p73 = por %p71, %p72
    %p74 = scmp.ne.s32.totalorder %s66, %s68
    %p75 = scmp.eq.s32.totalorder %s16, 1
    %p76 = por %p74, %p75
    %p77 = scmp.ne.s32.totalorder %s68, %s69
    %p78 = scmp.eq.s32.totalorder %s16, 0
    %p79 = por %p77, %p78
    %p80 = scmp.ne.s32.totalorder %s68, %s69
    %p81 = scmp.eq.s32.totalorder %s17, 1
    %p82 = por %p80, %p81
    %p84 = scmp.ne.s32.totalorder %s69, %s83
    %p85 = scmp.eq.s32.totalorder %s17, 0
    %p86 = por %p84, %p85
    %s88 = sadd.s32 %s87, 1
    %p91 = scmp.eq.s32.totalorder %s11, 1
    %p92 = scmp.ne.s32.totalorder %s87, %s89
    %p93 = scmp.eq.s32.totalorder %s11, 0
    %p94 = por %p92, %p93
    %p95 = scmp.ne.s32.totalorder %s87, %s89
    %p96 = scmp.eq.s32.totalorder %s16, 1
    %p97 = por %p95, %p96
    %p98 = scmp.ne.s32.totalorder %s89, %s90
    %p99 = scmp.eq.s32.totalorder %s16, 0
    %p100 = por %p98, %p99
    %p101 = scmp.ne.s32.totalorder %s89, %s90
    %p102 = scmp.eq.s32.totalorder %s17, 1
    %p103 = por %p101, %p102
    %p105 = scmp.ne.s32.totalorder %s90, %s104
    %p106 = scmp.eq.s32.totalorder %s17, 0
    %p107 = por %p105, %p106
    %s109 = sadd.s32 %s108, 1
    %p112 = scmp.eq.s32.totalorder %s11, 1
    %p113 = scmp.ne.s32.totalorder %s108, %s110
    %p114 = scmp.eq.s32.totalorder %s11, 0
    %p115 = por %p113, %p114
    %p116 = scmp.ne.s32.totalorder %s108, %s110
    %p117 = scmp.eq.s32.totalorder %s16, 1
    %p118 = por %p116, %p117
    %p119 = scmp.ne.s32.totalorder %s110, %s111
    %p120 = scmp.eq.s32.totalorder %s16, 0
    %p121 = por %p119, %p120
    %p122 = scmp.ne.s32.totalorder %s110, %s111
    %p123 = scmp.eq.s32.totalorder %s17, 1
    %p124 = por %p122, %p123
    %p126 = scmp.ne.s32.totalorder %s111, %s125
    %p127 = scmp.eq.s32.totalorder %s17, 0
    %p128 = por %p126, %p127
    %s129 = ssub.s32 %s11, %s18
    %p130 = scmp.eq.s32.totalorder %s129, 0
    %s132 = sadd.s32 %s131, 1
    %s133 = scalar_select %p130, %s131, %s132
    %p136 = pneg %p130
    %p137 = scmp.eq.s32.totalorder %s11, 1
    %p138 = por %p136, %p137
    %p139 = scmp.ne.s32.totalorder %s131, %s134
    %p140 = scmp.eq.s32.totalorder %s11, 0
    %p141 = por %p139, %p140
    %p142 = scmp.ne.s32.totalorder %s131, %s134
    %p143 = scmp.eq.s32.totalorder %s16, 1
    %p144 = por %p142, %p143
    %p145 = scmp.ne.s32.totalorder %s134, %s135
    %p146 = scmp.eq.s32.totalorder %s16, 0
    %p147 = por %p145, %p146
    %p148 = scmp.ne.s32.totalorder %s134, %s135
    %p149 = scmp.eq.s32.totalorder %s17, 1
    %p150 = por %p148, %p149
    %p152 = scmp.ne.s32.totalorder %s135, %s151
    %p153 = scmp.eq.s32.totalorder %s17, 0
    %p154 = por %p152, %p153
    %p155 = scmp.le.s32.totalorder 1, %s11
    %p156 = scmp.lt.s32.totalorder %s11, 3
    %p157 = pnand %p155, %p156
    %p158 = pneg %p157
    // Predicated region
    $region9: #{spatial_attention_forward.1} parent=5 // pred_check
      _
    $region10: #{spatial_attention_forward.1} parent=5 // pred_check_branch
      %160 = sbr.rel (%p157) target = $region12
    $region11: #{spatial_attention_forward.1} parent=5 // pred_region
      %s161 = ssub.s32 %s11, 1
      // Predicated region
      $region13: #{spatial_attention_forward.1} parent=11 // pred_check
        %p162 = pneg %p58
      $region14: #{spatial_attention_forward.1} parent=11 // pred_check_branch
        %164 = sbr.rel (%p162) target = $region16
      $region15: #{spatial_attention_forward.1} parent=11 // pred_region
        _
      $region16: #{spatial_attention_forward.1} parent=11 // pred_fallthru
        _
      // Predicated region
      $region17: #{spatial_attention_forward.1} parent=11 // pred_check
        %p165 = pneg %p79
      $region18: #{spatial_attention_forward.1} parent=11 // pred_check_branch
        %167 = sbr.rel (%p165) target = $region20
      $region19: #{spatial_attention_forward.1} parent=11 // pred_region
        _
      $region20: #{spatial_attention_forward.1} parent=11 // pred_fallthru
        _
      // Predicated region
      $region21: #{spatial_attention_forward.1} parent=11 // pred_check
        %p168 = pneg %p100
      $region22: #{spatial_attention_forward.1} parent=11 // pred_check_branch
        %170 = sbr.rel (%p168) target = $region24
      $region23: #{spatial_attention_forward.1} parent=11 // pred_region
        _
      $region24: #{spatial_attention_forward.1} parent=11 // pred_fallthru
        _
      // Predicated region
      $region25: #{spatial_attention_forward.1} parent=11 // pred_check
        %p171 = pneg %p121
      $region26: #{spatial_attention_forward.1} parent=11 // pred_check_branch
        %173 = sbr.rel (%p171) target = $region28
      $region27: #{spatial_attention_forward.1} parent=11 // pred_region
        _
      $region28: #{spatial_attention_forward.1} parent=11 // pred_fallthru
        _
    $region12: #{spatial_attention_forward.1} parent=5 // pred_fallthru
      _
    %p174 = scmp.lt.s32.totalorder %s11, 2
    // Predicated region
    $region29: #{spatial_attention_forward.1} parent=5 // pred_check
      %p175 = pneg %p174
    $region30: #{spatial_attention_forward.1} parent=5 // pred_check_branch
      %177 = sbr.rel (%p175) target = $region32
    $region31: #{spatial_attention_forward.1} parent=5 // pred_region
      // Predicated region
      $region33: #{spatial_attention_forward.1} parent=31 // pred_check
        %p178 = pneg %p31
      $region34: #{spatial_attention_forward.1} parent=31 // pred_check_branch
        %180 = sbr.rel (%p178) target = $region36
      $region35: #{spatial_attention_forward.1} parent=31 // pred_region
        %p181 = scmp.lt.s32.totalorder %s11, 1
        %s182 = scalar_select %p181, %s11, 1
        %s183 = smul.addr %s182, 23
        %s184 = smul.addr %s183, 8
        %s185 = scalar_lea.vmem %s0, %s184
      $region36: #{spatial_attention_forward.1} parent=31 // pred_fallthru
        _
    $region32: #{spatial_attention_forward.1} parent=5 // pred_fallthru
      _
    %p186 = scmp.le.s32.totalorder 1, %s11
    %p187 = scmp.lt.s32.totalorder %s11, 3
    %p188 = pnand %p186, %p187
    %p189 = pneg %p188
    // Predicated region
    $region37: #{spatial_attention_forward.1} parent=5 // pred_check
      _
    $region38: #{spatial_attention_forward.1} parent=5 // pred_check_branch
      %191 = sbr.rel (%p188) target = $region40
    $region39: #{spatial_attention_forward.1} parent=5 // pred_region
      %s192 = ssub.s32 %s11, 1
      %p193 = scmp.lt.s32.totalorder %s16, 1
      %s194 = scalar_select %p193, %s16, 1
      %s195 = smul.addr %s194, 23
      %s196 = smul.addr %s195, 8
      %s197 = scalar_lea.vmem %s0, %s196
      %p198 = pneg %p37
      %p199 = pneg %p34
      %p200 = pneg %p58
      %p201 = pneg %p55
      %p202 = pneg %p79
      %p203 = pneg %p76
      %p204 = pneg %p100
      %p205 = pneg %p97
      %p206 = pneg %p121
      %p207 = pneg %p118
      %p208 = pneg %p147
      %p209 = pneg %p144
      %p210 = scmp.lt.s32.totalorder %s16, 1
      %s211 = scalar_select %p210, %s16, 1
      %s212 = smul.addr %s211, 3
      %s213 = smul.addr %s212, 8
      %s214 = scalar_lea.vmem %s5, %s213
      %p215 = scmp.lt.s32.totalorder %s16, 1
      %s216 = scalar_select %p215, %s16, 1
      %s217 = smul.addr %s216, 23
      %s218 = smul.addr %s217, 8
      %s219 = scalar_lea.vmem %s0, %s218
      %p220 = scmp.lt.s32.totalorder %s16, 1
      %s221 = scalar_select %p220, %s16, 1
      %s222 = smul.addr %s221, 3
      %s223 = smul.addr %s222, 8
      %s224 = scalar_lea.vmem %s5, %s223
      %v225 = vld [vmem:[%s1] sm:$0xff]
      %v226 = vld [vmem:[%s1 + $0x8] sm:$0xff]
      %v227 = vld [vmem:[%s1 + $0x10] sm:$0xff]
      %v228 = vld [vmem:[%s1 + $0x18] sm:$0xff]
      %v229 = vld [vmem:[%s1 + $0x20] sm:$0xff]
      %v230 = vld [vmem:[%s1 + $0x28] sm:$0xff]
      %v231 = vld [vmem:[%s1 + $0x30] sm:$0xff]
      %v232 = vld [vmem:[%s1 + $0x38] sm:$0xff]
      %v233 = vld [vmem:[%s1 + $0x40] sm:$0xff]
      %v234 = vld [vmem:[%s1 + $0x48] sm:$0xff]
      %v235 = vld [vmem:[%s1 + $0x50] sm:$0xff]
      %v236 = vld [vmem:[%s1 + $0x58] sm:$0xff]
      %v237 = vld [vmem:[%s1 + $0x60] sm:$0xff]
      %v238 = vld [vmem:[%s1 + $0x68] sm:$0xff]
      %v239 = vld [vmem:[%s1 + $0x70] sm:$0xff]
      %v240 = vld [vmem:[%s1 + $0x78] sm:$0xff]
      %v241 = vld [vmem:[%s1 + $0x80] sm:$0xff]
      %v242 = vld [vmem:[%s1 + $0x88] sm:$0xff]
      %v243 = vld [vmem:[%s1 + $0x90] sm:$0xff]
      %v244 = vld [vmem:[%s1 + $0x98] sm:$0xff]
      %v245 = vld [vmem:[%s1 + $0xa0] sm:$0xff]
      %v246 = vld [vmem:[%s1 + $0xa8] sm:$0xff]
      %v247 = vld [vmem:[%s1 + $0xb0] sm:$0xff]
      %v248 = vld [vmem:[%s1 + $0xb8] sm:$0xff]
      %v249 = vld [vmem:[%s1 + $0xc0] sm:$0xff]
      %v250 = vld [vmem:[%s1 + $0xc8] sm:$0xff]
      %v251 = vld [vmem:[%s1 + $0xd0] sm:$0xff]
      %v252 = vld [vmem:[%s1 + $0xd8] sm:$0xff]
      %v253 = vld [vmem:[%s1 + $0xe0] sm:$0xff]
      %v254 = vld [vmem:[%s1 + $0xe8] sm:$0xff]
      %v255 = vld [vmem:[%s1 + $0xf0] sm:$0xff]
      %v256 = vld [vmem:[%s1 + $0xf8] sm:$0xff]
      %v257 = vld [vmem:[%s1 + $0x100] sm:$0xff]
      %v258 = vld [vmem:[%s1 + $0x108] sm:$0xff]
      %v259 = vld [vmem:[%s1 + $0x110] sm:$0xff]
      %v260 = vld [vmem:[%s1 + $0x118] sm:$0xff]
      %v261 = vld [vmem:[%s1 + $0x120] sm:$0xff]
      %v262 = vld [vmem:[%s1 + $0x128] sm:$0xff]
      %v263 = vld [vmem:[%s1 + $0x130] sm:$0xff]
      %v264 = vld [vmem:[%s1 + $0x138] sm:$0xff]
      %v265 = vld [vmem:[%s1 + $0x140] sm:$0xff]
      %v266 = vld [vmem:[%s1 + $0x148] sm:$0xff]
      %v267 = vld [vmem:[%s1 + $0x150] sm:$0xff]
      %v268 = vld [vmem:[%s1 + $0x158] sm:$0xff]
      %v269 = vld [vmem:[%s219] sm:$0xff]
      %v270 = vld [vmem:[%s219 + $0x8] sm:$0xff]
      %v271 = vld [vmem:[%s219 + $0x10] sm:$0xff]
      %v272 = vld [vmem:[%s219 + $0x18] sm:$0xff]
      %v273 = vld [vmem:[%s219 + $0x20] sm:$0xff]
      %v274 = vld [vmem:[%s219 + $0x28] sm:$0xff]
      %v275 = vld [vmem:[%s219 + $0x30] sm:$0xff]
      %v276 = vld [vmem:[%s219 + $0x38] sm:$0xff]
      %v277 = vld [vmem:[%s219 + $0x40] sm:$0xff]
      %v278 = vld [vmem:[%s219 + $0x48] sm:$0xff]
      %v279 = vld [vmem:[%s219 + $0x50] sm:$0xff]
      %v280 = vld [vmem:[%s219 + $0x58] sm:$0xff]
      %v281 = vld [vmem:[%s219 + $0x60] sm:$0xff]
      %v282 = vld [vmem:[%s219 + $0x68] sm:$0xff]
      %v283 = vld [vmem:[%s219 + $0x70] sm:$0xff]
      %v284 = vld [vmem:[%s219 + $0x78] sm:$0xff]
      %v285 = vld [vmem:[%s219 + $0x80] sm:$0xff]
      %v286 = vld [vmem:[%s219 + $0x88] sm:$0xff]
      %v287 = vld [vmem:[%s219 + $0x90] sm:$0xff]
      %v288 = vld [vmem:[%s219 + $0x98] sm:$0xff]
      %v289 = vld [vmem:[%s219 + $0xa0] sm:$0xff]
      %v290 = vld [vmem:[%s219 + $0xa8] sm:$0xff]
      %v291 = vld [vmem:[%s219 + $0xb0] sm:$0xf]
      %v292 = vld [vmem:[%s2] sm:$0xff]
      %v293 = vld [vmem:[%s2 + $0x8] sm:$0xff]
      %v294 = vld [vmem:[%s2 + $0x10] sm:$0xff]
      %v295 = vld [vmem:[%s2 + $0x18] sm:$0xff]
      %v296 = vld [vmem:[%s2 + $0x20] sm:$0xff]
      %v297 = vld [vmem:[%s2 + $0x28] sm:$0xff]
      %v298 = vld [vmem:[%s2 + $0x30] sm:$0xff]
      %v299 = vld [vmem:[%s2 + $0x38] sm:$0xff]
      %v300 = vld [vmem:[%s2 + $0x40] sm:$0xff]
      %v301 = vld [vmem:[%s2 + $0x48] sm:$0xff]
      %v302 = vld [vmem:[%s2 + $0x50] sm:$0xff]
      %v303 = vld [vmem:[%s2 + $0x58] sm:$0xff]
      %v304 = vld [vmem:[%s2 + $0x60] sm:$0xff]
      %v305 = vld [vmem:[%s2 + $0x68] sm:$0xff]
      %v306 = vld [vmem:[%s2 + $0x70] sm:$0xff]
      %v307 = vld [vmem:[%s2 + $0x78] sm:$0xff]
      %v308 = vld [vmem:[%s2 + $0x80] sm:$0xff]
      %v309 = vld [vmem:[%s2 + $0x88] sm:$0xff]
      %v310 = vld [vmem:[%s2 + $0x90] sm:$0xff]
      %v311 = vld [vmem:[%s2 + $0x98] sm:$0xff]
      %v312 = vld [vmem:[%s2 + $0xa0] sm:$0xff]
      %v313 = vld [vmem:[%s2 + $0xa8] sm:$0xff]
      %315 = vset.pattern.permute.xlu0 0
      %316 = vperm.xlu0 %315, %v292
      %v317 = vpop.permute.xlu0 %316
      %320 = vset.pattern.permute.xlu0 0
      %321 = vperm.xlu0 %320, %v293
      %v322 = vpop.permute.xlu0 %321
      %325 = vset.pattern.permute.xlu0 0
      %326 = vperm.xlu0 %325, %v294
      %v327 = vpop.permute.xlu0 %326
      %330 = vset.pattern.permute.xlu0 0
      %331 = vperm.xlu0 %330, %v295
      %v332 = vpop.permute.xlu0 %331
      %335 = vset.pattern.permute.xlu0 0
      %336 = vperm.xlu0 %335, %v296
      %v337 = vpop.permute.xlu0 %336
      %340 = vset.pattern.permute.xlu0 0
      %341 = vperm.xlu0 %340, %v297
      %v342 = vpop.permute.xlu0 %341
      %345 = vset.pattern.permute.xlu0 0
      %346 = vperm.xlu0 %345, %v298
      %v347 = vpop.permute.xlu0 %346
      %350 = vset.pattern.permute.xlu0 0
      %351 = vperm.xlu0 %350, %v299
      %v352 = vpop.permute.xlu0 %351
      %355 = vset.pattern.permute.xlu0 0
      %356 = vperm.xlu0 %355, %v300
      %v357 = vpop.permute.xlu0 %356
      %360 = vset.pattern.permute.xlu0 0
      %361 = vperm.xlu0 %360, %v301
      %v362 = vpop.permute.xlu0 %361
      %365 = vset.pattern.permute.xlu0 0
      %366 = vperm.xlu0 %365, %v302
      %v367 = vpop.permute.xlu0 %366
      %370 = vset.pattern.permute.xlu0 0
      %371 = vperm.xlu0 %370, %v303
      %v372 = vpop.permute.xlu0 %371
      %375 = vset.pattern.permute.xlu0 0
      %376 = vperm.xlu0 %375, %v304
      %v377 = vpop.permute.xlu0 %376
      %380 = vset.pattern.permute.xlu0 0
      %381 = vperm.xlu0 %380, %v305
      %v382 = vpop.permute.xlu0 %381
      %385 = vset.pattern.permute.xlu0 0
      %386 = vperm.xlu0 %385, %v306
      %v387 = vpop.permute.xlu0 %386
      %390 = vset.pattern.permute.xlu0 0
      %391 = vperm.xlu0 %390, %v307
      %v392 = vpop.permute.xlu0 %391
      %395 = vset.pattern.permute.xlu0 0
      %396 = vperm.xlu0 %395, %v308
      %v397 = vpop.permute.xlu0 %396
      %400 = vset.pattern.permute.xlu0 0
      %401 = vperm.xlu0 %400, %v309
      %v402 = vpop.permute.xlu0 %401
      %405 = vset.pattern.permute.xlu0 0
      %406 = vperm.xlu0 %405, %v310
      %v407 = vpop.permute.xlu0 %406
      %410 = vset.pattern.permute.xlu0 0
      %411 = vperm.xlu0 %410, %v311
      %v412 = vpop.permute.xlu0 %411
      %415 = vset.pattern.permute.xlu0 0
      %416 = vperm.xlu0 %415, %v312
      %v417 = vpop.permute.xlu0 %416
      %420 = vset.pattern.permute.xlu0 0
      %421 = vperm.xlu0 %420, %v313
      %v422 = vpop.permute.xlu0 %421
      %vm424 = vcmask 424960
      %v426 = vsel %vm424, %v226, 0
      %v429 = vsel %vm424, %v228, 0
      %v432 = vsel %vm424, %v230, 0
      %v435 = vsel %vm424, %v232, 0
      %v438 = vsel %vm424, %v234, 0
      %v441 = vsel %vm424, %v236, 0
      %v444 = vsel %vm424, %v238, 0
      %v447 = vsel %vm424, %v240, 0
      %v450 = vsel %vm424, %v242, 0
      %v453 = vsel %vm424, %v244, 0
      %v456 = vsel %vm424, %v246, 0
      %v459 = vsel %vm424, %v248, 0
      %v462 = vsel %vm424, %v250, 0
      %v465 = vsel %vm424, %v252, 0
      %v468 = vsel %vm424, %v254, 0
      %v471 = vsel %vm424, %v256, 0
      %v474 = vsel %vm424, %v258, 0
      %v477 = vsel %vm424, %v260, 0
      %v480 = vsel %vm424, %v262, 0
      %v483 = vsel %vm424, %v264, 0
      %v486 = vsel %vm424, %v266, 0
      %v489 = vsel %vm424, %v268, 0
      %vm491 = vcmask 1043456
      %v493 = vsel %vm491, %v291, 0
      %495 = vmatprep.subr.mxu0 0.0
      %496 = vmatpush1.msra.mxu0 %v269
      %497 = vmatprep.subr.mxu0 0.0
      %498 = vmatpush1.msra.mxu0 %v270
      %499 = vmatprep.subr.mxu0 0.0
      %500 = vmatpush1.msra.mxu0 %v271
      %501 = vmatprep.subr.mxu0 0.0
      %502 = vmatpush1.msra.mxu0 %v272
      %503 = vmatprep.subr.mxu0 0.0
      %504 = vmatpush1.msra.mxu0 %v273
      %505 = vmatprep.subr.mxu0 0.0
      %506 = vmatpush1.msra.mxu0 %v274
      %507 = vmatprep.subr.mxu0 0.0
      %508 = vmatpush1.msra.mxu0 %v275
      %509 = vmatprep.subr.mxu0 0.0
      %510 = vmatpush1.msra.mxu0 %v276
      %511 = vmatprep.subr.mxu0 0.0
      %512 = vmatpush1.msra.mxu0 %v277
      %513 = vmatprep.subr.mxu0 0.0
      %514 = vmatpush1.msra.mxu0 %v278
      %515 = vmatprep.subr.mxu0 0.0
      %516 = vmatpush1.msra.mxu0 %v279
      %517 = vmatprep.subr.mxu0 0.0
      %518 = vmatpush1.msra.mxu0 %v280
      %519 = vmatprep.subr.mxu0 0.0
      %520 = vmatpush1.msra.mxu0 %v281
      %521 = vmatprep.subr.mxu0 0.0
      %522 = vmatpush1.msra.mxu0 %v282
      %523 = vmatprep.subr.mxu0 0.0
      %524 = vmatpush1.msra.mxu0 %v283
      %525 = vmatprep.subr.mxu0 0.0
      %526 = vmatpush1.msra.mxu0 %v284
      %527 = vmatprep.subr.mxu0 0.0
      %528 = vmatpush1.msra.mxu0 %v285
      %529 = vmatprep.subr.mxu0 0.0
      %530 = vmatpush1.msra.mxu0 %v286
      %531 = vmatprep.subr.mxu0 0.0
      %532 = vmatpush1.msra.mxu0 %v287
      %533 = vmatprep.subr.mxu0 0.0
      %534 = vmatpush1.msra.mxu0 %v288
      %535 = vmatprep.subr.mxu0 0.0
      %536 = vmatpush1.msra.mxu0 %v289
      %537 = vmatprep.subr.mxu0 0.0
      %538 = vmatpush1.msra.mxu0 %v290
      %539 = vmatprep.subr.mxu0 0.0
      %540 = vmatpush1.msra.mxu0 %v493
      %541 = vmatprep.subr.mxu0 0.0
      %542 = vmatpush1.msra.mxu0 0.0
      %543 = vmatprep.subr.mxu0 0.0
      %544 = vmatpush1.msra.mxu0 0.0
      %545 = vmatprep.subr.mxu0 0.0
      %546 = vmatpush1.msra.mxu0 0.0
      %547 = vmatprep.subr.mxu0 0.0
      %548 = vmatpush1.msra.mxu0 0.0
      %549 = vmatprep.subr.mxu0 0.0
      %550 = vmatpush1.msra.mxu0 0.0
      %551 = vmatprep.subr.mxu0 0.0
      %552 = vmatpush1.msra.mxu0 0.0
      %553 = vmatprep.subr.mxu0 0.0
      %554 = vmatpush1.msra.mxu0 0.0
      %555 = vmatprep.subr.mxu0 0.0
      %556 = vmatpush1.msra.mxu0 0.0
      %557 = vmatprep.subr.mxu0 0.0
      %558 = vmatpush1.msra.mxu0 0.0
      %559 = vmatprep.mubr.f32.mxu0 %v426
      %560 = vmatmul.mubr.f32.gmra.mrb[0].mxu0 %v225
      %v561 = vpop.f32.mrb[0].mxu0
      %v562 = vadd.f32 %v317, %v561
      %v563 = vpop.f32.mrb[0].mxu0
      %564 = vmatprep.mubr.f32.mxu0 %v429
      %565 = vmatmul.mubr.f32.gmra.mrb[0].mxu0 %v227
      %v566 = vpop.f32.mrb[0].mxu0
      %v567 = vadd.f32 %v322, %v566
      %v568 = vpop.f32.mrb[0].mxu0
      %569 = vmatprep.mubr.f32.mxu0 %v432
      %570 = vmatmul.mubr.f32.gmra.mrb[0].mxu0 %v229
      %v571 = vpop.f32.mrb[0].mxu0
      %v572 = vadd.f32 %v327, %v571
      %v573 = vpop.f32.mrb[0].mxu0
      %574 = vmatprep.mubr.f32.mxu0 %v435
      %575 = vmatmul.mubr.f32.gmra.mrb[0].mxu0 %v231
      %v576 = vpop.f32.mrb[0].mxu0
      %v577 = vadd.f32 %v332, %v576
      %v578 = vpop.f32.mrb[0].mxu0
      %579 = vmatprep.mubr.f32.mxu0 %v438
      %580 = vmatmul.mubr.f32.gmra.mrb[0].mxu0 %v233
      %v581 = vpop.f32.mrb[0].mxu0
      %v582 = vadd.f32 %v337, %v581
      %v583 = vpop.f32.mrb[0].mxu0
      %584 = vmatprep.mubr.f32.mxu0 %v441
      %585 = vmatmul.mubr.f32.gmra.mrb[0].mxu0 %v235
      %v586 = vpop.f32.mrb[0].mxu0
      %v587 = vadd.f32 %v342, %v586
      %v588 = vpop.f32.mrb[0].mxu0
      %589 = vmatprep.mubr.f32.mxu0 %v444
      %590 = vmatmul.mubr.f32.gmra.mrb[0].mxu0 %v237
      %v591 = vpop.f32.mrb[0].mxu0
      %v592 = vadd.f32 %v347, %v591
      %v593 = vpop.f32.mrb[0].mxu0
      %594 = vmatprep.mubr.f32.mxu0 %v447
      %595 = vmatmul.mubr.f32.gmra.mrb[0].mxu0 %v239
      %v596 = vpop.f32.mrb[0].mxu0
      %v597 = vadd.f32 %v352, %v596
      %v598 = vpop.f32.mrb[0].mxu0
      %599 = vmatprep.mubr.f32.mxu0 %v450
      %600 = vmatmul.mubr.f32.gmra.mrb[0].mxu0 %v241
      %v601 = vpop.f32.mrb[0].mxu0
      %v602 = vadd.f32 %v357, %v601
      %v603 = vpop.f32.mrb[0].mxu0
      %604 = vmatprep.mubr.f32.mxu0 %v453
      %605 = vmatmul.mubr.f32.gmra.mrb[0].mxu0 %v243
      %v606 = vpop.f32.mrb[0].mxu0
      %v607 = vadd.f32 %v362, %v606
      %v608 = vpop.f32.mrb[0].mxu0
      %609 = vmatprep.mubr.f32.mxu0 %v456
      %610 = vmatmul.mubr.f32.gmra.mrb[0].mxu0 %v245
      %v611 = vpop.f32.mrb[0].mxu0
      %v612 = vadd.f32 %v367, %v611
      %v613 = vpop.f32.mrb[0].mxu0
      %614 = vmatprep.mubr.f32.mxu0 %v459
      %615 = vmatmul.mubr.f32.gmra.mrb[0].mxu0 %v247
      %v616 = vpop.f32.mrb[0].mxu0
      %v617 = vadd.f32 %v372, %v616
      %v618 = vpop.f32.mrb[0].mxu0
      %619 = vmatprep.mubr.f32.mxu0 %v462
      %620 = vmatmul.mubr.f32.gmra.mrb[0].mxu0 %v249
      %v621 = vpop.f32.mrb[0].mxu0
      %v622 = vadd.f32 %v377, %v621
      %v623 = vpop.f32.mrb[0].mxu0
      %624 = vmatprep.mubr.f32.mxu0 %v465
      %625 = vmatmul.mubr.f32.gmra.mrb[0].mxu0 %v251
      %v626 = vpop.f32.mrb[0].mxu0
      %v627 = vadd.f32 %v382, %v626
      %v628 = vpop.f32.mrb[0].mxu0
      %629 = vmatprep.mubr.f32.mxu0 %v468
      %630 = vmatmul.mubr.f32.gmra.mrb[0].mxu0 %v253
      %v631 = vpop.f32.mrb[0].mxu0
      %v632 = vadd.f32 %v387, %v631
      %v633 = vpop.f32.mrb[0].mxu0
      %634 = vmatprep.mubr.f32.mxu0 %v471
      %635 = vmatmul.mubr.f32.gmra.mrb[0].mxu0 %v255
      %v636 = vpop.f32.mrb[0].mxu0
      %v637 = vadd.f32 %v392, %v636
      %v638 = vpop.f32.mrb[0].mxu0
      %639 = vmatprep.mubr.f32.mxu0 %v474
      %640 = vmatmul.mubr.f32.gmra.mrb[0].mxu0 %v257
      %v641 = vpop.f32.mrb[0].mxu0
      %v642 = vadd.f32 %v397, %v641
      %v643 = vpop.f32.mrb[0].mxu0
      %644 = vmatprep.mubr.f32.mxu0 %v477
      %645 = vmatmul.mubr.f32.gmra.mrb[0].mxu0 %v259
      %v646 = vpop.f32.mrb[0].mxu0
      %v647 = vadd.f32 %v402, %v646
      %v648 = vpop.f32.mrb[0].mxu0
      %649 = vmatprep.mubr.f32.mxu0 %v480
      %650 = vmatmul.mubr.f32.gmra.mrb[0].mxu0 %v261
      %v651 = vpop.f32.mrb[0].mxu0
      %v652 = vadd.f32 %v407, %v651
      %v653 = vpop.f32.mrb[0].mxu0
      %654 = vmatprep.mubr.f32.mxu0 %v483
      %655 = vmatmul.mubr.f32.gmra.mrb[0].mxu0 %v263
      %v656 = vpop.f32.mrb[0].mxu0
      %v657 = vadd.f32 %v412, %v656
      %v658 = vpop.f32.mrb[0].mxu0
      %659 = vmatprep.mubr.f32.mxu0 %v486
      %660 = vmatmul.mubr.f32.gmra.mrb[0].mxu0 %v265
      %v661 = vpop.f32.mrb[0].mxu0
      %v662 = vadd.f32 %v417, %v661
      %v663 = vpop.f32.mrb[0].mxu0
      %664 = vmatprep.mubr.f32.mxu0 %v489
      %665 = vmatmul.mubr.f32.gmra.mrb[0].mxu0 %v267
      %v666 = vpop.f32.mrb[0].mxu0
      %v667 = vadd.f32 %v422, %v666
      %v668 = vpop.f32.mrb[0].mxu0
      %669 = vdwg.mxu0
      %vm670 = vcmask 523264
      %671 = vst.msk [vmem:[#allocation2] sm:$0xff] %vm670, %v562
      %672 = vst.msk [vmem:[#allocation2 + $0x8] sm:$0xff] %vm670, %v567
      %673 = vst.msk [vmem:[#allocation2 + $0x10] sm:$0xff] %vm670, %v572
      %674 = vst.msk [vmem:[#allocation2 + $0x18] sm:$0xff] %vm670, %v577
      %675 = vst.msk [vmem:[#allocation2 + $0x20] sm:$0xff] %vm670, %v582
      %676 = vst.msk [vmem:[#allocation2 + $0x28] sm:$0xff] %vm670, %v587
      %677 = vst.msk [vmem:[#allocation2 + $0x30] sm:$0xff] %vm670, %v592
      %678 = vst.msk [vmem:[#allocation2 + $0x38] sm:$0xff] %vm670, %v597
      %679 = vst.msk [vmem:[#allocation2 + $0x40] sm:$0xff] %vm670, %v602
      %680 = vst.msk [vmem:[#allocation2 + $0x48] sm:$0xff] %vm670, %v607
      %681 = vst.msk [vmem:[#allocation2 + $0x50] sm:$0xff] %vm670, %v612
      %682 = vst.msk [vmem:[#allocation2 + $0x58] sm:$0xff] %vm670, %v617
      %683 = vst.msk [vmem:[#allocation2 + $0x60] sm:$0xff] %vm670, %v622
      %684 = vst.msk [vmem:[#allocation2 + $0x68] sm:$0xff] %vm670, %v627
      %685 = vst.msk [vmem:[#allocation2 + $0x70] sm:$0xff] %vm670, %v632
      %686 = vst.msk [vmem:[#allocation2 + $0x78] sm:$0xff] %vm670, %v637
      %687 = vst.msk [vmem:[#allocation2 + $0x80] sm:$0xff] %vm670, %v642
      %688 = vst.msk [vmem:[#allocation2 + $0x88] sm:$0xff] %vm670, %v647
      %689 = vst.msk [vmem:[#allocation2 + $0x90] sm:$0xff] %vm670, %v652
      %690 = vst.msk [vmem:[#allocation2 + $0x98] sm:$0xff] %vm670, %v657
      %691 = vst.msk [vmem:[#allocation2 + $0xa0] sm:$0xff] %vm670, %v662
      %692 = vst.msk [vmem:[#allocation2 + $0xa8] sm:$0xff] %vm670, %v667
      %v693 = vld [vmem:[#allocation2 + $0x10] sm:$0xff]
      %v694 = vld [vmem:[#allocation2 + $0x18] sm:$0xff]
      %v695 = vmul.f32 %v693, 0.31622776
      %v696 = vmul.f32 %v694, 0.31622776
      %v697 = vld [vmem:[#allocation2 + $0x50] sm:$0xff]
      %v698 = vld [vmem:[#allocation2 + $0x58] sm:$0xff]
      %v699 = vld [vmem:[#allocation2 + $0x90] sm:$0xff]
      %700 = vxpose.xlu0.b32.start [1/16] %v695, 128
      %701 = vxpose.xlu0.b32.cont [2/16] %v696, 128
      %702 = vxpose.xlu0.b32.cont [3/16] 0.0, 128
      %703 = vxpose.xlu0.b32.cont [4/16] 0.0, 128
      %704 = vxpose.xlu0.b32.cont [5/16] 0.0, 128
      %705 = vxpose.xlu0.b32.cont [6/16] 0.0, 128
      %706 = vxpose.xlu0.b32.cont [7/16] 0.0, 128
      %707 = vxpose.xlu0.b32.cont [8/16] 0.0, 128
      %708 = vxpose.xlu0.b32.cont [9/16] 0.0, 128
      %709 = vxpose.xlu0.b32.cont [10/16] 0.0, 128
      %710 = vxpose.xlu0.b32.cont [11/16] 0.0, 128
      %711 = vxpose.xlu0.b32.cont [12/16] 0.0, 128
      %712 = vxpose.xlu0.b32.cont [13/16] 0.0, 128
      %713 = vxpose.xlu0.b32.cont [14/16] 0.0, 128
      %714 = vxpose.xlu0.b32.cont [15/16] 0.0, 128
      %715 = vxpose.xlu0.b32.end [16/16] 0.0, 128
      %v716 = vpop.trf.xlu0
      %v717 = vpop.trf.xlu0
      %v718 = vpop.trf.xlu0
      %v719 = vpop.trf.xlu0
      %v720 = vpop.trf.xlu0
      %v721 = vpop.trf.xlu0
      %v722 = vpop.trf.xlu0
      %v723 = vpop.trf.xlu0
      %v724 = vpop.trf.xlu0
      %v725 = vpop.trf.xlu0
      %v726 = vpop.trf.xlu0
      %v727 = vpop.trf.xlu0
      %v728 = vpop.trf.xlu0
      %v729 = vpop.trf.xlu0
      %v730 = vpop.trf.xlu0
      %v731 = vpop.trf.xlu0
      %vm732 = vcmask 130048
      %v734 = vsel %vm732, %v716, 0
      %v737 = vsel %vm732, %v717, 0
      %v740 = vsel %vm732, %v718, 0
      %v743 = vsel %vm732, %v719, 0
      %v746 = vsel %vm732, %v720, 0
      %v749 = vsel %vm732, %v721, 0
      %v752 = vsel %vm732, %v722, 0
      %v755 = vsel %vm732, %v723, 0
      %757 = vmatprep.subr.mxu0 0.0
      %758 = vmatpush1.msra.mxu0 %v697
      %759 = vmatprep.subr.mxu0 0.0
      %760 = vmatpush1.msra.mxu0 %v698
      %761 = vmatprep.subr.mxu0 0.0
      %762 = vmatpush1.msra.mxu0 0.0
      %763 = vmatprep.subr.mxu0 0.0
      %764 = vmatpush1.msra.mxu0 0.0
      %765 = vmatprep.subr.mxu0 0.0
      %766 = vmatpush1.msra.mxu0 0.0
      %767 = vmatprep.subr.mxu0 0.0
      %768 = vmatpush1.msra.mxu0 0.0
      %769 = vmatprep.subr.mxu0 0.0
      %770 = vmatpush1.msra.mxu0 0.0
      %771 = vmatprep.subr.mxu0 0.0
      %772 = vmatpush1.msra.mxu0 0.0
      %773 = vmatprep.subr.mxu0 0.0
      %774 = vmatpush1.msra.mxu0 0.0
      %775 = vmatprep.subr.mxu0 0.0
      %776 = vmatpush1.msra.mxu0 0.0
      %777 = vmatprep.subr.mxu0 0.0
      %778 = vmatpush1.msra.mxu0 0.0
      %779 = vmatprep.subr.mxu0 0.0
      %780 = vmatpush1.msra.mxu0 0.0
      %781 = vmatprep.subr.mxu0 0.0
      %782 = vmatpush1.msra.mxu0 0.0
      %783 = vmatprep.subr.mxu0 0.0
      %784 = vmatpush1.msra.mxu0 0.0
      %785 = vmatprep.subr.mxu0 0.0
      %786 = vmatpush1.msra.mxu0 0.0
      %787 = vmatprep.subr.mxu0 0.0
      %788 = vmatpush1.msra.mxu0 0.0
      %789 = vmatprep.subr.mxu0 0.0
      %790 = vmatpush1.msra.mxu0 0.0
      %791 = vmatprep.subr.mxu0 0.0
      %792 = vmatpush1.msra.mxu0 0.0
      %793 = vmatprep.subr.mxu0 0.0
      %794 = vmatpush1.msra.mxu0 0.0
      %795 = vmatprep.subr.mxu0 0.0
      %796 = vmatpush1.msra.mxu0 0.0
      %797 = vmatprep.subr.mxu0 0.0
      %798 = vmatpush1.msra.mxu0 0.0
      %799 = vmatprep.subr.mxu0 0.0
      %800 = vmatpush1.msra.mxu0 0.0
      %801 = vmatprep.subr.mxu0 0.0
      %802 = vmatpush1.msra.mxu0 0.0
      %803 = vmatprep.subr.mxu0 0.0
      %804 = vmatpush1.msra.mxu0 0.0
      %805 = vmatprep.subr.mxu0 0.0
      %806 = vmatpush1.msra.mxu0 0.0
      %807 = vmatprep.subr.mxu0 0.0
      %808 = vmatpush1.msra.mxu0 0.0
      %809 = vmatprep.subr.mxu0 0.0
      %810 = vmatpush1.msra.mxu0 0.0
      %811 = vmatprep.subr.mxu0 0.0
      %812 = vmatpush1.msra.mxu0 0.0
      %813 = vmatprep.subr.mxu0 0.0
      %814 = vmatpush1.msra.mxu0 0.0
      %815 = vmatprep.subr.mxu0 0.0
      %816 = vmatpush1.msra.mxu0 0.0
      %817 = vmatprep.subr.mxu0 0.0
      %818 = vmatpush1.msra.mxu0 0.0
      %819 = vmatprep.subr.mxu0 0.0
      %820 = vmatpush1.msra.mxu0 0.0
      %821 = vmatprep.mubr.f32.mxu0 0.0
      %822 = vmatmul.mubr.f32.gmra.mrb[0].mxu0 %v734
      %v823 = vpop.f32.mrb[0].mxu0
      %v824 = vadd.f32 0.0, %v823
      %v825 = vpop.f32.mrb[0].mxu0
      %826 = vmatprep.mubr.f32.mxu0 0.0
      %827 = vmatmul.mubr.f32.gmra.mrb[0].mxu0 %v737
      %v828 = vpop.f32.mrb[0].mxu0
      %v829 = vadd.f32 0.0, %v828
      %v830 = vpop.f32.mrb[0].mxu0
      %831 = vmatprep.mubr.f32.mxu0 0.0
      %832 = vmatmul.mubr.f32.gmra.mrb[0].mxu0 %v740
      %v833 = vpop.f32.mrb[0].mxu0
      %v834 = vadd.f32 0.0, %v833
      %v835 = vpop.f32.mrb[0].mxu0
      %836 = vmatprep.mubr.f32.mxu0 0.0
      %837 = vmatmul.mubr.f32.gmra.mrb[0].mxu0 %v743
      %v838 = vpop.f32.mrb[0].mxu0
      %v839 = vadd.f32 0.0, %v838
      %v840 = vpop.f32.mrb[0].mxu0
      %841 = vmatprep.mubr.f32.mxu0 0.0
      %842 = vmatmul.mubr.f32.gmra.mrb[0].mxu0 %v746
      %v843 = vpop.f32.mrb[0].mxu0
      %v844 = vadd.f32 0.0, %v843
      %v845 = vpop.f32.mrb[0].mxu0
      %846 = vmatprep.mubr.f32.mxu0 0.0
      %847 = vmatmul.mubr.f32.gmra.mrb[0].mxu0 %v749
      %v848 = vpop.f32.mrb[0].mxu0
      %v849 = vadd.f32 0.0, %v848
      %v850 = vpop.f32.mrb[0].mxu0
      %851 = vmatprep.mubr.f32.mxu0 0.0
      %852 = vmatmul.mubr.f32.gmra.mrb[0].mxu0 %v752
      %v853 = vpop.f32.mrb[0].mxu0
      %v854 = vadd.f32 0.0, %v853
      %v855 = vpop.f32.mrb[0].mxu0
      %856 = vmatprep.mubr.f32.mxu0 0.0
      %857 = vmatmul.mubr.f32.gmra.mrb[0].mxu0 %v755
      %v858 = vpop.f32.mrb[0].mxu0
      %v859 = vadd.f32 0.0, %v858
      %v860 = vpop.f32.mrb[0].mxu0
      %861 = vdwg.mxu0
      %v862 = vsel %vm670, %v824, -inf
      %863 = vmax.xlane.f32.xlu0 %v862
      %v864 = vpop.xlane.xlu0 %863
      %v865 = vsel %vm670, %v829, -inf
      %866 = vmax.xlane.f32.xlu0 %v865
      %v867 = vpop.xlane.xlu0 %866
      %v868 = vsel %vm670, %v834, -inf
      %869 = vmax.xlane.f32.xlu0 %v868
      %v870 = vpop.xlane.xlu0 %869
      %v871 = vsel %vm670, %v839, -inf
      %872 = vmax.xlane.f32.xlu0 %v871
      %v873 = vpop.xlane.xlu0 %872
      %v874 = vsel %vm670, %v844, -inf
      %875 = vmax.xlane.f32.xlu0 %v874
      %v876 = vpop.xlane.xlu0 %875
      %v877 = vsel %vm670, %v849, -inf
      %878 = vmax.xlane.f32.xlu0 %v877
      %v879 = vpop.xlane.xlu0 %878
      %v880 = vsel %vm670, %v854, -inf
      %881 = vmax.xlane.f32.xlu0 %v880
      %v882 = vpop.xlane.xlu0 %881
      %v883 = vsel %vm670, %v859, -inf
      %884 = vmax.xlane.f32.xlu0 %v883
      %v885 = vpop.xlane.xlu0 %884
      %v886 = vsub.f32 %v824, %v864
      %v887 = vsub.f32 %v829, %v867
      %v888 = vsub.f32 %v834, %v870
      %v889 = vsub.f32 %v839, %v873
      %v890 = vsub.f32 %v844, %v876
      %v891 = vsub.f32 %v849, %v879
      %v892 = vsub.f32 %v854, %v882
      %v893 = vsub.f32 %v859, %v885
      %v894 = vmul.f32 %v886, 1.442695
      %v895 = vpow.pop %v894
      %v896 = vmul.f32 %v887, 1.442695
      %v897 = vpow.pop %v896
      %v898 = vmul.f32 %v888, 1.442695
      %v899 = vpow.pop %v898
      %v900 = vmul.f32 %v889, 1.442695
      %v901 = vpow.pop %v900
      %v902 = vmul.f32 %v890, 1.442695
      %v903 = vpow.pop %v902
      %v904 = vmul.f32 %v891, 1.442695
      %v905 = vpow.pop %v904
      %v906 = vmul.f32 %v892, 1.442695
      %v907 = vpow.pop %v906
      %v908 = vmul.f32 %v893, 1.442695
      %v909 = vpow.pop %v908
      %v910 = vsel %vm670, %v895, 0.0
      %911 = vadd.xlane.f32.xlu0 %v910
      %v912 = vpop.xlane.xlu0 %911
      %v913 = vsel %vm670, %v897, 0.0
      %914 = vadd.xlane.f32.xlu0 %v913
      %v915 = vpop.xlane.xlu0 %914
      %v916 = vsel %vm670, %v899, 0.0
      %917 = vadd.xlane.f32.xlu0 %v916
      %v918 = vpop.xlane.xlu0 %917
      %v919 = vsel %vm670, %v901, 0.0
      %920 = vadd.xlane.f32.xlu0 %v919
      %v921 = vpop.xlane.xlu0 %920
      %v922 = vsel %vm670, %v903, 0.0
      %923 = vadd.xlane.f32.xlu0 %v922
      %v924 = vpop.xlane.xlu0 %923
      %v925 = vsel %vm670, %v905, 0.0
      %926 = vadd.xlane.f32.xlu0 %v925
      %v927 = vpop.xlane.xlu0 %926
      %v928 = vsel %vm670, %v907, 0.0
      %929 = vadd.xlane.f32.xlu0 %v928
      %v930 = vpop.xlane.xlu0 %929
      %v931 = vsel %vm670, %v909, 0.0
      %932 = vadd.xlane.f32.xlu0 %v931
      %v933 = vpop.xlane.xlu0 %932
      %v934 = vrcp.pop %v912
      %v935 = vrcp.pop %v915
      %v936 = vrcp.pop %v918
      %v937 = vrcp.pop %v921
      %v938 = vrcp.pop %v924
      %v939 = vrcp.pop %v927
      %v940 = vrcp.pop %v930
      %v941 = vrcp.pop %v933
      %v942 = vmul.f32 %v895, %v934
      %v943 = vmul.f32 %v897, %v935
      %v944 = vmul.f32 %v899, %v936
      %v945 = vmul.f32 %v901, %v937
      %v946 = vmul.f32 %v903, %v938
      %v947 = vmul.f32 %v905, %v939
      %v948 = vmul.f32 %v907, %v940
      %v949 = vmul.f32 %v909, %v941
      %v951 = vsel %vm670, %v699, 0
      %v954 = vsel %vm670, %v942, 0
      %v957 = vsel %vm670, %v943, 0
      %v960 = vsel %vm670, %v944, 0
      %v963 = vsel %vm670, %v945, 0
      %v966 = vsel %vm670, %v946, 0
      %v969 = vsel %vm670, %v947, 0
      %v972 = vsel %vm670, %v948, 0
      %v975 = vsel %vm670, %v949, 0
      %977 = vmatprep.subr.mxu0 0.0
      %978 = vmatpush1.xpose.msra.mxu0 %v954
      %979 = vmatprep.subr.mxu0 0.0
      %980 = vmatpush1.xpose.msra.mxu0 %v957
      %981 = vmatprep.subr.mxu0 0.0
      %982 = vmatpush1.xpose.msra.mxu0 %v960
      %983 = vmatprep.subr.mxu0 0.0
      %984 = vmatpush1.xpose.msra.mxu0 %v963
      %985 = vmatprep.subr.mxu0 0.0
      %986 = vmatpush1.xpose.msra.mxu0 %v966
      %987 = vmatprep.subr.mxu0 0.0
      %988 = vmatpush1.xpose.msra.mxu0 %v969
      %989 = vmatprep.subr.mxu0 0.0
      %990 = vmatpush1.xpose.msra.mxu0 %v972
      %991 = vmatprep.subr.mxu0 0.0
      %992 = vmatpush1.xpose.msra.mxu0 %v975
      %993 = vmatprep.subr.mxu0 0.0
      %994 = vmatpush1.xpose.msra.mxu0 0.0
      %995 = vmatprep.subr.mxu0 0.0
      %996 = vmatpush1.xpose.msra.mxu0 0.0
      %997 = vmatprep.subr.mxu0 0.0
      %998 = vmatpush1.xpose.msra.mxu0 0.0
      %999 = vmatprep.subr.mxu0 0.0
      %1000 = vmatpush1.xpose.msra.mxu0 0.0
      %1001 = vmatprep.subr.mxu0 0.0
      %1002 = vmatpush1.xpose.msra.mxu0 0.0
      %1003 = vmatprep.subr.mxu0 0.0
      %1004 = vmatpush1.xpose.msra.mxu0 0.0
      %1005 = vmatprep.subr.mxu0 0.0
      %1006 = vmatpush1.xpose.msra.mxu0 0.0
      %1007 = vmatprep.subr.mxu0 0.0
      %1008 = vmatpush1.xpose.msra.mxu0 0.0
      %1009 = vmatprep.subr.mxu0 0.0
      %1010 = vmatpush1.xpose.msra.mxu0 0.0
      %1011 = vmatprep.subr.mxu0 0.0
      %1012 = vmatpush1.xpose.msra.mxu0 0.0
      %1013 = vmatprep.subr.mxu0 0.0
      %1014 = vmatpush1.xpose.msra.mxu0 0.0
      %1015 = vmatprep.subr.mxu0 0.0
      %1016 = vmatpush1.xpose.msra.mxu0 0.0
      %1017 = vmatprep.subr.mxu0 0.0
      %1018 = vmatpush1.xpose.msra.mxu0 0.0
      %1019 = vmatprep.subr.mxu0 0.0
      %1020 = vmatpush1.xpose.msra.mxu0 0.0
      %1021 = vmatprep.subr.mxu0 0.0
      %1022 = vmatpush1.xpose.msra.mxu0 0.0
      %1023 = vmatprep.subr.mxu0 0.0
      %1024 = vmatpush1.xpose.msra.mxu0 0.0
      %1025 = vmatprep.subr.mxu0 0.0
      %1026 = vmatpush1.xpose.msra.mxu0 0.0
      %1027 = vmatprep.subr.mxu0 0.0
      %1028 = vmatpush1.xpose.msra.mxu0 0.0
      %1029 = vmatprep.subr.mxu0 0.0
      %1030 = vmatpush1.xpose.msra.mxu0 0.0
      %1031 = vmatprep.subr.mxu0 0.0
      %1032 = vmatpush1.xpose.msra.mxu0 0.0
      %1033 = vmatprep.subr.mxu0 0.0
      %1034 = vmatpush1.xpose.msra.mxu0 0.0
      %1035 = vmatprep.subr.mxu0 0.0
      %1036 = vmatpush1.xpose.msra.mxu0 0.0
      %1037 = vmatprep.subr.mxu0 0.0
      %1038 = vmatpush1.xpose.msra.mxu0 0.0
      %1039 = vmatprep.subr.mxu0 0.0
      %1040 = vmatpush1.xpose.msra.mxu0 0.0
      %1041 = vmatprep.mubr.f32.mxu0 0.0
      %1042 = vmatmul.mubr.f32.gmra.mrb[0].mxu0 %v951
      %v1043 = vpop.f32.mrb[0].mxu0
      %v1044 = vadd.f32 0.0, %v1043
      %v1045 = vpop.f32.mrb[0].mxu0
      %1046 = vdwg.mxu0
      %v1047 = vld [vmem:[#allocation2 + $0x20] sm:$0xff]
      %v1048 = vld [vmem:[#allocation2 + $0x28] sm:$0xff]
      %v1049 = vmul.f32 %v1047, 0.31622776
      %v1050 = vmul.f32 %v1048, 0.31622776
      %v1051 = vld [vmem:[#allocation2 + $0x60] sm:$0xff]
      %v1052 = vld [vmem:[#allocation2 + $0x68] sm:$0xff]
      %v1053 = vld [vmem:[#allocation2 + $0x98] sm:$0xff]
      %1054 = vxpose.xlu0.b32.start [1/16] %v1049, 128
      %1055 = vxpose.xlu0.b32.cont [2/16] %v1050, 128
      %1056 = vxpose.xlu0.b32.cont [3/16] 0.0, 128
      %1057 = vxpose.xlu0.b32.cont [4/16] 0.0, 128
      %1058 = vxpose.xlu0.b32.cont [5/16] 0.0, 128
      %1059 = vxpose.xlu0.b32.cont [6/16] 0.0, 128
      %1060 = vxpose.xlu0.b32.cont [7/16] 0.0, 128
      %1061 = vxpose.xlu0.b32.cont [8/16] 0.0, 128
      %1062 = vxpose.xlu0.b32.cont [9/16] 0.0, 128
      %1063 = vxpose.xlu0.b32.cont [10/16] 0.0, 128
      %1064 = vxpose.xlu0.b32.cont [11/16] 0.0, 128
      %1065 = vxpose.xlu0.b32.cont [12/16] 0.0, 128
      %1066 = vxpose.xlu0.b32.cont [13/16] 0.0, 128
      %1067 = vxpose.xlu0.b32.cont [14/16] 0.0, 128
      %1068 = vxpose.xlu0.b32.cont [15/16] 0.0, 128
      %1069 = vxpose.xlu0.b32.end [16/16] 0.0, 128
      %v1070 = vpop.trf.xlu0
      %v1071 = vpop.trf.xlu0
      %v1072 = vpop.trf.xlu0
      %v1073 = vpop.trf.xlu0
      %v1074 = vpop.trf.xlu0
      %v1075 = vpop.trf.xlu0
      %v1076 = vpop.trf.xlu0
      %v1077 = vpop.trf.xlu0
      %v1078 = vpop.trf.xlu0
      %v1079 = vpop.trf.xlu0
      %v1080 = vpop.trf.xlu0
      %v1081 = vpop.trf.xlu0
      %v1082 = vpop.trf.xlu0
      %v1083 = vpop.trf.xlu0
      %v1084 = vpop.trf.xlu0
      %v1085 = vpop.trf.xlu0
      %v1087 = vsel %vm732, %v1070, 0
      %v1090 = vsel %vm732, %v1071, 0
      %v1093 = vsel %vm732, %v1072, 0
      %v1096 = vsel %vm732, %v1073, 0
      %v1099 = vsel %vm732, %v1074, 0
      %v1102 = vsel %vm732, %v1075, 0
      %v1105 = vsel %vm732, %v1076, 0
      %v1108 = vsel %vm732, %v1077, 0
      %1110 = vmatprep.subr.mxu0 0.0
      %1111 = vmatpush1.msra.mxu0 %v1051
      %1112 = vmatprep.subr.mxu0 0.0
      %1113 = vmatpush1.msra.mxu0 %v1052
      %1114 = vmatprep.subr.mxu0 0.0
      %1115 = vmatpush1.msra.mxu0 0.0
      %1116 = vmatprep.subr.mxu0 0.0
      %1117 = vmatpush1.msra.mxu0 0.0
      %1118 = vmatprep.subr.mxu0 0.0
      %1119 = vmatpush1.msra.mxu0 0.0
      %1120 = vmatprep.subr.mxu0 0.0
      %1121 = vmatpush1.msra.mxu0 0.0
      %1122 = vmatprep.subr.mxu0 0.0
      %1123 = vmatpush1.msra.mxu0 0.0
      %1124 = vmatprep.subr.mxu0 0.0
      %1125 = vmatpush1.msra.mxu0 0.0
      %1126 = vmatprep.subr.mxu0 0.0
      %1127 = vmatpush1.msra.mxu0 0.0
      %1128 = vmatprep.subr.mxu0 0.0
      %1129 = vmatpush1.msra.mxu0 0.0
      %1130 = vmatprep.subr.mxu0 0.0
      %1131 = vmatpush1.msra.mxu0 0.0
      %1132 = vmatprep.subr.mxu0 0.0
      %1133 = vmatpush1.msra.mxu0 0.0
      %1134 = vmatprep.subr.mxu0 0.0
      %1135 = vmatpush1.msra.mxu0 0.0
      %1136 = vmatprep.subr.mxu0 0.0
      %1137 = vmatpush1.msra.mxu0 0.0
      %1138 = vmatprep.subr.mxu0 0.0
      %1139 = vmatpush1.msra.mxu0 0.0
      %1140 = vmatprep.subr.mxu0 0.0
      %1141 = vmatpush1.msra.mxu0 0.0
      %1142 = vmatprep.subr.mxu0 0.0
      %1143 = vmatpush1.msra.mxu0 0.0
      %1144 = vmatprep.subr.mxu0 0.0
      %1145 = vmatpush1.msra.mxu0 0.0
      %1146 = vmatprep.subr.mxu0 0.0
      %1147 = vmatpush1.msra.mxu0 0.0
      %1148 = vmatprep.subr.mxu0 0.0
      %1149 = vmatpush1.msra.mxu0 0.0
      %1150 = vmatprep.subr.mxu0 0.0
      %1151 = vmatpush1.msra.mxu0 0.0
      %1152 = vmatprep.subr.mxu0 0.0
      %1153 = vmatpush1.msra.mxu0 0.0
      %1154 = vmatprep.subr.mxu0 0.0
      %1155 = vmatpush1.msra.mxu0 0.0
      %1156 = vmatprep.subr.mxu0 0.0
      %1157 = vmatpush1.msra.mxu0 0.0
      %1158 = vmatprep.subr.mxu0 0.0
      %1159 = vmatpush1.msra.mxu0 0.0
      %1160 = vmatprep.subr.mxu0 0.0
      %1161 = vmatpush1.msra.mxu0 0.0
      %1162 = vmatprep.subr.mxu0 0.0
      %1163 = vmatpush1.msra.mxu0 0.0
      %1164 = vmatprep.subr.mxu0 0.0
      %1165 = vmatpush1.msra.mxu0 0.0
      %1166 = vmatprep.subr.mxu0 0.0
      %1167 = vmatpush1.msra.mxu0 0.0
      %1168 = vmatprep.subr.mxu0 0.0
      %1169 = vmatpush1.msra.mxu0 0.0
      %1170 = vmatprep.subr.mxu0 0.0
      %1171 = vmatpush1.msra.mxu0 0.0
      %1172 = vmatprep.subr.mxu0 0.0
      %1173 = vmatpush1.msra.mxu0 0.0
      %1174 = vmatprep.mubr.f32.mxu0 0.0
      %1175 = vmatmul.mubr.f32.gmra.mrb[0].mxu0 %v1087
      %v1176 = vpop.f32.mrb[0].mxu0
      %v1177 = vadd.f32 0.0, %v1176
      %v1178 = vpop.f32.mrb[0].mxu0
      %1179 = vmatprep.mubr.f32.mxu0 0.0
      %1180 = vmatmul.mubr.f32.gmra.mrb[0].mxu0 %v1090
      %v1181 = vpop.f32.mrb[0].mxu0
      %v1182 = vadd.f32 0.0, %v1181
      %v1183 = vpop.f32.mrb[0].mxu0
      %1184 = vmatprep.mubr.f32.mxu0 0.0
      %1185 = vmatmul.mubr.f32.gmra.mrb[0].mxu0 %v1093
      %v1186 = vpop.f32.mrb[0].mxu0
      %v1187 = vadd.f32 0.0, %v1186
      %v1188 = vpop.f32.mrb[0].mxu0
      %1189 = vmatprep.mubr.f32.mxu0 0.0
      %1190 = vmatmul.mubr.f32.gmra.mrb[0].mxu0 %v1096
      %v1191 = vpop.f32.mrb[0].mxu0
      %v1192 = vadd.f32 0.0, %v1191
      %v1193 = vpop.f32.mrb[0].mxu0
      %1194 = vmatprep.mubr.f32.mxu0 0.0
      %1195 = vmatmul.mubr.f32.gmra.mrb[0].mxu0 %v1099
      %v1196 = vpop.f32.mrb[0].mxu0
      %v1197 = vadd.f32 0.0, %v1196
      %v1198 = vpop.f32.mrb[0].mxu0
      %1199 = vmatprep.mubr.f32.mxu0 0.0
      %1200 = vmatmul.mubr.f32.gmra.mrb[0].mxu0 %v1102
      %v1201 = vpop.f32.mrb[0].mxu0
      %v1202 = vadd.f32 0.0, %v1201
      %v1203 = vpop.f32.mrb[0].mxu0
      %1204 = vmatprep.mubr.f32.mxu0 0.0
      %1205 = vmatmul.mubr.f32.gmra.mrb[0].mxu0 %v1105
      %v1206 = vpop.f32.mrb[0].mxu0
      %v1207 = vadd.f32 0.0, %v1206
      %v1208 = vpop.f32.mrb[0].mxu0
      %1209 = vmatprep.mubr.f32.mxu0 0.0
      %1210 = vmatmul.mubr.f32.gmra.mrb[0].mxu0 %v1108
      %v1211 = vpop.f32.mrb[0].mxu0
      %v1212 = vadd.f32 0.0, %v1211
      %v1213 = vpop.f32.mrb[0].mxu0
      %1214 = vdwg.mxu0
      %v1215 = vsel %vm670, %v1177, -inf
      %1216 = vmax.xlane.f32.xlu0 %v1215
      %v1217 = vpop.xlane.xlu0 %1216
      %v1218 = vsel %vm670, %v1182, -inf
      %1219 = vmax.xlane.f32.xlu0 %v1218
      %v1220 = vpop.xlane.xlu0 %1219
      %v1221 = vsel %vm670, %v1187, -inf
      %1222 = vmax.xlane.f32.xlu0 %v1221
      %v1223 = vpop.xlane.xlu0 %1222
      %v1224 = vsel %vm670, %v1192, -inf
      %1225 = vmax.xlane.f32.xlu0 %v1224
      %v1226 = vpop.xlane.xlu0 %1225
      %v1227 = vsel %vm670, %v1197, -inf
      %1228 = vmax.xlane.f32.xlu0 %v1227
      %v1229 = vpop.xlane.xlu0 %1228
      %v1230 = vsel %vm670, %v1202, -inf
      %1231 = vmax.xlane.f32.xlu0 %v1230
      %v1232 = vpop.xlane.xlu0 %1231
      %v1233 = vsel %vm670, %v1207, -inf
      %1234 = vmax.xlane.f32.xlu0 %v1233
      %v1235 = vpop.xlane.xlu0 %1234
      %v1236 = vsel %vm670, %v1212, -inf
      %1237 = vmax.xlane.f32.xlu0 %v1236
      %v1238 = vpop.xlane.xlu0 %1237
      %v1239 = vsub.f32 %v1177, %v1217
      %v1240 = vsub.f32 %v1182, %v1220
      %v1241 = vsub.f32 %v1187, %v1223
      %v1242 = vsub.f32 %v1192, %v1226
      %v1243 = vsub.f32 %v1197, %v1229
      %v1244 = vsub.f32 %v1202, %v1232
      %v1245 = vsub.f32 %v1207, %v1235
      %v1246 = vsub.f32 %v1212, %v1238
      %v1247 = vmul.f32 %v1239, 1.442695
      %v1248 = vpow.pop %v1247
      %v1249 = vmul.f32 %v1240, 1.442695
      %v1250 = vpow.pop %v1249
      %v1251 = vmul.f32 %v1241, 1.442695
      %v1252 = vpow.pop %v1251
      %v1253 = vmul.f32 %v1242, 1.442695
      %v1254 = vpow.pop %v1253
      %v1255 = vmul.f32 %v1243, 1.442695
      %v1256 = vpow.pop %v1255
      %v1257 = vmul.f32 %v1244, 1.442695
      %v1258 = vpow.pop %v1257
      %v1259 = vmul.f32 %v1245, 1.442695
      %v1260 = vpow.pop %v1259
      %v1261 = vmul.f32 %v1246, 1.442695
      %v1262 = vpow.pop %v1261
      %v1263 = vsel %vm670, %v1248, 0.0
      %1264 = vadd.xlane.f32.xlu0 %v1263
      %v1265 = vpop.xlane.xlu0 %1264
      %v1266 = vsel %vm670, %v1250, 0.0
      %1267 = vadd.xlane.f32.xlu0 %v1266
      %v1268 = vpop.xlane.xlu0 %1267
      %v1269 = vsel %vm670, %v1252, 0.0
      %1270 = vadd.xlane.f32.xlu0 %v1269
      %v1271 = vpop.xlane.xlu0 %1270
      %v1272 = vsel %vm670, %v1254, 0.0
      %1273 = vadd.xlane.f32.xlu0 %v1272
      %v1274 = vpop.xlane.xlu0 %1273
      %v1275 = vsel %vm670, %v1256, 0.0
      %1276 = vadd.xlane.f32.xlu0 %v1275
      %v1277 = vpop.xlane.xlu0 %1276
      %v1278 = vsel %vm670, %v1258, 0.0
      %1279 = vadd.xlane.f32.xlu0 %v1278
      %v1280 = vpop.xlane.xlu0 %1279
      %v1281 = vsel %vm670, %v1260, 0.0
      %1282 = vadd.xlane.f32.xlu0 %v1281
      %v1283 = vpop.xlane.xlu0 %1282
      %v1284 = vsel %vm670, %v1262, 0.0
      %1285 = vadd.xlane.f32.xlu0 %v1284
      %v1286 = vpop.xlane.xlu0 %1285
      %v1287 = vrcp.pop %v1265
      %v1288 = vrcp.pop %v1268
      %v1289 = vrcp.pop %v1271
      %v1290 = vrcp.pop %v1274
      %v1291 = vrcp.pop %v1277
      %v1292 = vrcp.pop %v1280
      %v1293 = vrcp.pop %v1283
      %v1294 = vrcp.pop %v1286
      %v1295 = vmul.f32 %v1248, %v1287
      %v1296 = vmul.f32 %v1250, %v1288
      %v1297 = vmul.f32 %v1252, %v1289
      %v1298 = vmul.f32 %v1254, %v1290
      %v1299 = vmul.f32 %v1256, %v1291
      %v1300 = vmul.f32 %v1258, %v1292
      %v1301 = vmul.f32 %v1260, %v1293
      %v1302 = vmul.f32 %v1262, %v1294
      %v1304 = vsel %vm670, %v1053, 0
      %v1307 = vsel %vm670, %v1295, 0
      %v1310 = vsel %vm670, %v1296, 0
      %v1313 = vsel %vm670, %v1297, 0
      %v1316 = vsel %vm670, %v1298, 0
      %v1319 = vsel %vm670, %v1299, 0
      %v1322 = vsel %vm670, %v1300, 0
      %v1325 = vsel %vm670, %v1301, 0
      %v1328 = vsel %vm670, %v1302, 0
      %1330 = vmatprep.subr.mxu0 0.0
      %1331 = vmatpush1.xpose.msra.mxu0 %v1307
      %1332 = vmatprep.subr.mxu0 0.0
      %1333 = vmatpush1.xpose.msra.mxu0 %v1310
      %1334 = vmatprep.subr.mxu0 0.0
      %1335 = vmatpush1.xpose.msra.mxu0 %v1313
      %1336 = vmatprep.subr.mxu0 0.0
      %1337 = vmatpush1.xpose.msra.mxu0 %v1316
      %1338 = vmatprep.subr.mxu0 0.0
      %1339 = vmatpush1.xpose.msra.mxu0 %v1319
      %1340 = vmatprep.subr.mxu0 0.0
      %1341 = vmatpush1.xpose.msra.mxu0 %v1322
      %1342 = vmatprep.subr.mxu0 0.0
      %1343 = vmatpush1.xpose.msra.mxu0 %v1325
      %1344 = vmatprep.subr.mxu0 0.0
      %1345 = vmatpush1.xpose.msra.mxu0 %v1328
      %1346 = vmatprep.subr.mxu0 0.0
      %1347 = vmatpush1.xpose.msra.mxu0 0.0
      %1348 = vmatprep.subr.mxu0 0.0
      %1349 = vmatpush1.xpose.msra.mxu0 0.0
      %1350 = vmatprep.subr.mxu0 0.0
      %1351 = vmatpush1.xpose.msra.mxu0 0.0
      %1352 = vmatprep.subr.mxu0 0.0
      %1353 = vmatpush1.xpose.msra.mxu0 0.0
      %1354 = vmatprep.subr.mxu0 0.0
      %1355 = vmatpush1.xpose.msra.mxu0 0.0
      %1356 = vmatprep.subr.mxu0 0.0
      %1357 = vmatpush1.xpose.msra.mxu0 0.0
      %1358 = vmatprep.subr.mxu0 0.0
      %1359 = vmatpush1.xpose.msra.mxu0 0.0
      %1360 = vmatprep.subr.mxu0 0.0
      %1361 = vmatpush1.xpose.msra.mxu0 0.0
      %1362 = vmatprep.subr.mxu0 0.0
      %1363 = vmatpush1.xpose.msra.mxu0 0.0
      %1364 = vmatprep.subr.mxu0 0.0
      %1365 = vmatpush1.xpose.msra.mxu0 0.0
      %1366 = vmatprep.subr.mxu0 0.0
      %1367 = vmatpush1.xpose.msra.mxu0 0.0
      %1368 = vmatprep.subr.mxu0 0.0
      %1369 = vmatpush1.xpose.msra.mxu0 0.0
      %1370 = vmatprep.subr.mxu0 0.0
      %1371 = vmatpush1.xpose.msra.mxu0 0.0
      %1372 = vmatprep.subr.mxu0 0.0
      %1373 = vmatpush1.xpose.msra.mxu0 0.0
      %1374 = vmatprep.subr.mxu0 0.0
      %1375 = vmatpush1.xpose.msra.mxu0 0.0
      %1376 = vmatprep.subr.mxu0 0.0
      %1377 = vmatpush1.xpose.msra.mxu0 0.0
      %1378 = vmatprep.subr.mxu0 0.0
      %1379 = vmatpush1.xpose.msra.mxu0 0.0
      %1380 = vmatprep.subr.mxu0 0.0
      %1381 = vmatpush1.xpose.msra.mxu0 0.0
      %1382 = vmatprep.subr.mxu0 0.0
      %1383 = vmatpush1.xpose.msra.mxu0 0.0
      %1384 = vmatprep.subr.mxu0 0.0
      %1385 = vmatpush1.xpose.msra.mxu0 0.0
      %1386 = vmatprep.subr.mxu0 0.0
      %1387 = vmatpush1.xpose.msra.mxu0 0.0
      %1388 = vmatprep.subr.mxu0 0.0
      %1389 = vmatpush1.xpose.msra.mxu0 0.0
      %1390 = vmatprep.subr.mxu0 0.0
      %1391 = vmatpush1.xpose.msra.mxu0 0.0
      %1392 = vmatprep.subr.mxu0 0.0
      %1393 = vmatpush1.xpose.msra.mxu0 0.0
      %1394 = vmatprep.mubr.f32.mxu0 0.0
      %1395 = vmatmul.mubr.f32.gmra.mrb[0].mxu0 %v1304
      %v1396 = vpop.f32.mrb[0].mxu0
      %v1397 = vadd.f32 0.0, %v1396
      %v1398 = vpop.f32.mrb[0].mxu0
      %1399 = vdwg.mxu0
      %v1400 = vld [vmem:[#allocation2 + $0x30] sm:$0xff]
      %v1401 = vld [vmem:[#allocation2 + $0x38] sm:$0xff]
      %v1402 = vmul.f32 %v1400, 0.31622776
      %v1403 = vmul.f32 %v1401, 0.31622776
      %v1404 = vld [vmem:[#allocation2 + $0x70] sm:$0xff]
      %v1405 = vld [vmem:[#allocation2 + $0x78] sm:$0xff]
      %v1406 = vld [vmem:[#allocation2 + $0xa0] sm:$0xff]
      %1407 = vxpose.xlu0.b32.start [1/16] %v1402, 128
      %1408 = vxpose.xlu0.b32.cont [2/16] %v1403, 128
      %1409 = vxpose.xlu0.b32.cont [3/16] 0.0, 128
      %1410 = vxpose.xlu0.b32.cont [4/16] 0.0, 128
      %1411 = vxpose.xlu0.b32.cont [5/16] 0.0, 128
      %1412 = vxpose.xlu0.b32.cont [6/16] 0.0, 128
      %1413 = vxpose.xlu0.b32.cont [7/16] 0.0, 128
      %1414 = vxpose.xlu0.b32.cont [8/16] 0.0, 128
      %1415 = vxpose.xlu0.b32.cont [9/16] 0.0, 128
      %1416 = vxpose.xlu0.b32.cont [10/16] 0.0, 128
      %1417 = vxpose.xlu0.b32.cont [11/16] 0.0, 128
      %1418 = vxpose.xlu0.b32.cont [12/16] 0.0, 128
      %1419 = vxpose.xlu0.b32.cont [13/16] 0.0, 128
      %1420 = vxpose.xlu0.b32.cont [14/16] 0.0, 128
      %1421 = vxpose.xlu0.b32.cont [15/16] 0.0, 128
      %1422 = vxpose.xlu0.b32.end [16/16] 0.0, 128
      %v1423 = vpop.trf.xlu0
      %v1424 = vpop.trf.xlu0
      %v1425 = vpop.trf.xlu0
      %v1426 = vpop.trf.xlu0
      %v1427 = vpop.trf.xlu0
      %v1428 = vpop.trf.xlu0
      %v1429 = vpop.trf.xlu0
      %v1430 = vpop.trf.xlu0
      %v1431 = vpop.trf.xlu0
      %v1432 = vpop.trf.xlu0
      %v1433 = vpop.trf.xlu0
      %v1434 = vpop.trf.xlu0
      %v1435 = vpop.trf.xlu0
      %v1436 = vpop.trf.xlu0
      %v1437 = vpop.trf.xlu0
      %v1438 = vpop.trf.xlu0
      %v1440 = vsel %vm732, %v1423, 0
      %v1443 = vsel %vm732, %v1424, 0
      %v1446 = vsel %vm732, %v1425, 0
      %v1449 = vsel %vm732, %v1426, 0
      %v1452 = vsel %vm732, %v1427, 0
      %v1455 = vsel %vm732, %v1428, 0
      %v1458 = vsel %vm732, %v1429, 0
      %v1461 = vsel %vm732, %v1430, 0
      %1463 = vmatprep.subr.mxu0 0.0
      %1464 = vmatpush1.msra.mxu0 %v1404
      %1465 = vmatprep.subr.mxu0 0.0
      %1466 = vmatpush1.msra.mxu0 %v1405
      %1467 = vmatprep.subr.mxu0 0.0
      %1468 = vmatpush1.msra.mxu0 0.0
      %1469 = vmatprep.subr.mxu0 0.0
      %1470 = vmatpush1.msra.mxu0 0.0
      %1471 = vmatprep.subr.mxu0 0.0
      %1472 = vmatpush1.msra.mxu0 0.0
      %1473 = vmatprep.subr.mxu0 0.0
      %1474 = vmatpush1.msra.mxu0 0.0
      %1475 = vmatprep.subr.mxu0 0.0
      %1476 = vmatpush1.msra.mxu0 0.0
      %1477 = vmatprep.subr.mxu0 0.0
      %1478 = vmatpush1.msra.mxu0 0.0
      %1479 = vmatprep.subr.mxu0 0.0
      %1480 = vmatpush1.msra.mxu0 0.0
      %1481 = vmatprep.subr.mxu0 0.0
      %1482 = vmatpush1.msra.mxu0 0.0
      %1483 = vmatprep.subr.mxu0 0.0
      %1484 = vmatpush1.msra.mxu0 0.0
      %1485 = vmatprep.subr.mxu0 0.0
      %1486 = vmatpush1.msra.mxu0 0.0
      %1487 = vmatprep.subr.mxu0 0.0
      %1488 = vmatpush1.msra.mxu0 0.0
      %1489 = vmatprep.subr.mxu0 0.0
      %1490 = vmatpush1.msra.mxu0 0.0
      %1491 = vmatprep.subr.mxu0 0.0
      %1492 = vmatpush1.msra.mxu0 0.0
      %1493 = vmatprep.subr.mxu0 0.0
      %1494 = vmatpush1.msra.mxu0 0.0
      %1495 = vmatprep.subr.mxu0 0.0
      %1496 = vmatpush1.msra.mxu0 0.0
      %1497 = vmatprep.subr.mxu0 0.0
      %1498 = vmatpush1.msra.mxu0 0.0
      %1499 = vmatprep.subr.mxu0 0.0
      %1500 = vmatpush1.msra.mxu0 0.0
      %1501 = vmatprep.subr.mxu0 0.0
      %1502 = vmatpush1.msra.mxu0 0.0
      %1503 = vmatprep.subr.mxu0 0.0
      %1504 = vmatpush1.msra.mxu0 0.0
      %1505 = vmatprep.subr.mxu0 0.0
      %1506 = vmatpush1.msra.mxu0 0.0
      %1507 = vmatprep.subr.mxu0 0.0
      %1508 = vmatpush1.msra.mxu0 0.0
      %1509 = vmatprep.subr.mxu0 0.0
      %1510 = vmatpush1.msra.mxu0 0.0
      %1511 = vmatprep.subr.mxu0 0.0
      %1512 = vmatpush1.msra.mxu0 0.0
      %1513 = vmatprep.subr.mxu0 0.0
      %1514 = vmatpush1.msra.mxu0 0.0
      %1515 = vmatprep.subr.mxu0 0.0
      %1516 = vmatpush1.msra.mxu0 0.0
      %1517 = vmatprep.subr.mxu0 0.0
      %1518 = vmatpush1.msra.mxu0 0.0
      %1519 = vmatprep.subr.mxu0 0.0
      %1520 = vmatpush1.msra.mxu0 0.0
      %1521 = vmatprep.subr.mxu0 0.0
      %1522 = vmatpush1.msra.mxu0 0.0
      %1523 = vmatprep.subr.mxu0 0.0
      %1524 = vmatpush1.msra.mxu0 0.0
      %1525 = vmatprep.subr.mxu0 0.0
      %1526 = vmatpush1.msra.mxu0 0.0
      %1527 = vmatprep.mubr.f32.mxu0 0.0
      %1528 = vmatmul.mubr.f32.gmra.mrb[0].mxu0 %v1440
      %v1529 = vpop.f32.mrb[0].mxu0
      %v1530 = vadd.f32 0.0, %v1529
      %v1531 = vpop.f32.mrb[0].mxu0
      %1532 = vmatprep.mubr.f32.mxu0 0.0
      %1533 = vmatmul.mubr.f32.gmra.mrb[0].mxu0 %v1443
      %v1534 = vpop.f32.mrb[0].mxu0
      %v1535 = vadd.f32 0.0, %v1534
      %v1536 = vpop.f32.mrb[0].mxu0
      %1537 = vmatprep.mubr.f32.mxu0 0.0
      %1538 = vmatmul.mubr.f32.gmra.mrb[0].mxu0 %v1446
      %v1539 = vpop.f32.mrb[0].mxu0
      %v1540 = vadd.f32 0.0, %v1539
      %v1541 = vpop.f32.mrb[0].mxu0
      %1542 = vmatprep.mubr.f32.mxu0 0.0
      %1543 = vmatmul.mubr.f32.gmra.mrb[0].mxu0 %v1449
      %v1544 = vpop.f32.mrb[0].mxu0
      %v1545 = vadd.f32 0.0, %v1544
      %v1546 = vpop.f32.mrb[0].mxu0
      %1547 = vmatprep.mubr.f32.mxu0 0.0
      %1548 = vmatmul.mubr.f32.gmra.mrb[0].mxu0 %v1452
      %v1549 = vpop.f32.mrb[0].mxu0
      %v1550 = vadd.f32 0.0, %v1549
      %v1551 = vpop.f32.mrb[0].mxu0
      %1552 = vmatprep.mubr.f32.mxu0 0.0
      %1553 = vmatmul.mubr.f32.gmra.mrb[0].mxu0 %v1455
      %v1554 = vpop.f32.mrb[0].mxu0
      %v1555 = vadd.f32 0.0, %v1554
      %v1556 = vpop.f32.mrb[0].mxu0
      %1557 = vmatprep.mubr.f32.mxu0 0.0
      %1558 = vmatmul.mubr.f32.gmra.mrb[0].mxu0 %v1458
      %v1559 = vpop.f32.mrb[0].mxu0
      %v1560 = vadd.f32 0.0, %v1559
      %v1561 = vpop.f32.mrb[0].mxu0
      %1562 = vmatprep.mubr.f32.mxu0 0.0
      %1563 = vmatmul.mubr.f32.gmra.mrb[0].mxu0 %v1461
      %v1564 = vpop.f32.mrb[0].mxu0
      %v1565 = vadd.f32 0.0, %v1564
      %v1566 = vpop.f32.mrb[0].mxu0
      %1567 = vdwg.mxu0
      %v1568 = vsel %vm670, %v1530, -inf
      %1569 = vmax.xlane.f32.xlu0 %v1568
      %v1570 = vpop.xlane.xlu0 %1569
      %v1571 = vsel %vm670, %v1535, -inf
      %1572 = vmax.xlane.f32.xlu0 %v1571
      %v1573 = vpop.xlane.xlu0 %1572
      %v1574 = vsel %vm670, %v1540, -inf
      %1575 = vmax.xlane.f32.xlu0 %v1574
      %v1576 = vpop.xlane.xlu0 %1575
      %v1577 = vsel %vm670, %v1545, -inf
      %1578 = vmax.xlane.f32.xlu0 %v1577
      %v1579 = vpop.xlane.xlu0 %1578
      %v1580 = vsel %vm670, %v1550, -inf
      %1581 = vmax.xlane.f32.xlu0 %v1580
      %v1582 = vpop.xlane.xlu0 %1581
      %v1583 = vsel %vm670, %v1555, -inf
      %1584 = vmax.xlane.f32.xlu0 %v1583
      %v1585 = vpop.xlane.xlu0 %1584
      %v1586 = vsel %vm670, %v1560, -inf
      %1587 = vmax.xlane.f32.xlu0 %v1586
      %v1588 = vpop.xlane.xlu0 %1587
      %v1589 = vsel %vm670, %v1565, -inf
      %1590 = vmax.xlane.f32.xlu0 %v1589
      %v1591 = vpop.xlane.xlu0 %1590
      %v1592 = vsub.f32 %v1530, %v1570
      %v1593 = vsub.f32 %v1535, %v1573
      %v1594 = vsub.f32 %v1540, %v1576
      %v1595 = vsub.f32 %v1545, %v1579
      %v1596 = vsub.f32 %v1550, %v1582
      %v1597 = vsub.f32 %v1555, %v1585
      %v1598 = vsub.f32 %v1560, %v1588
      %v1599 = vsub.f32 %v1565, %v1591
      %v1600 = vmul.f32 %v1592, 1.442695
      %v1601 = vpow.pop %v1600
      %v1602 = vmul.f32 %v1593, 1.442695
      %v1603 = vpow.pop %v1602
      %v1604 = vmul.f32 %v1594, 1.442695
      %v1605 = vpow.pop %v1604
      %v1606 = vmul.f32 %v1595, 1.442695
      %v1607 = vpow.pop %v1606
      %v1608 = vmul.f32 %v1596, 1.442695
      %v1609 = vpow.pop %v1608
      %v1610 = vmul.f32 %v1597, 1.442695
      %v1611 = vpow.pop %v1610
      %v1612 = vmul.f32 %v1598, 1.442695
      %v1613 = vpow.pop %v1612
      %v1614 = vmul.f32 %v1599, 1.442695
      %v1615 = vpow.pop %v1614
      %v1616 = vsel %vm670, %v1601, 0.0
      %1617 = vadd.xlane.f32.xlu0 %v1616
      %v1618 = vpop.xlane.xlu0 %1617
      %v1619 = vsel %vm670, %v1603, 0.0
      %1620 = vadd.xlane.f32.xlu0 %v1619
      %v1621 = vpop.xlane.xlu0 %1620
      %v1622 = vsel %vm670, %v1605, 0.0
      %1623 = vadd.xlane.f32.xlu0 %v1622
      %v1624 = vpop.xlane.xlu0 %1623
      %v1625 = vsel %vm670, %v1607, 0.0
      %1626 = vadd.xlane.f32.xlu0 %v1625
      %v1627 = vpop.xlane.xlu0 %1626
      %v1628 = vsel %vm670, %v1609, 0.0
      %1629 = vadd.xlane.f32.xlu0 %v1628
      %v1630 = vpop.xlane.xlu0 %1629
      %v1631 = vsel %vm670, %v1611, 0.0
      %1632 = vadd.xlane.f32.xlu0 %v1631
      %v1633 = vpop.xlane.xlu0 %1632
      %v1634 = vsel %vm670, %v1613, 0.0
      %1635 = vadd.xlane.f32.xlu0 %v1634
      %v1636 = vpop.xlane.xlu0 %1635
      %v1637 = vsel %vm670, %v1615, 0.0
      %1638 = vadd.xlane.f32.xlu0 %v1637
      %v1639 = vpop.xlane.xlu0 %1638
      %v1640 = vrcp.pop %v1618
      %v1641 = vrcp.pop %v1621
      %v1642 = vrcp.pop %v1624
      %v1643 = vrcp.pop %v1627
      %v1644 = vrcp.pop %v1630
      %v1645 = vrcp.pop %v1633
      %v1646 = vrcp.pop %v1636
      %v1647 = vrcp.pop %v1639
      %v1648 = vmul.f32 %v1601, %v1640
      %v1649 = vmul.f32 %v1603, %v1641
      %v1650 = vmul.f32 %v1605, %v1642
      %v1651 = vmul.f32 %v1607, %v1643
      %v1652 = vmul.f32 %v1609, %v1644
      %v1653 = vmul.f32 %v1611, %v1645
      %v1654 = vmul.f32 %v1613, %v1646
      %v1655 = vmul.f32 %v1615, %v1647
      %v1657 = vsel %vm670, %v1406, 0
      %v1660 = vsel %vm670, %v1648, 0
      %v1663 = vsel %vm670, %v1649, 0
      %v1666 = vsel %vm670, %v1650, 0
      %v1669 = vsel %vm670, %v1651, 0
      %v1672 = vsel %vm670, %v1652, 0
      %v1675 = vsel %vm670, %v1653, 0
      %v1678 = vsel %vm670, %v1654, 0
      %v1681 = vsel %vm670, %v1655, 0
      %1683 = vmatprep.subr.mxu0 0.0
      %1684 = vmatpush1.xpose.msra.mxu0 %v1660
      %1685 = vmatprep.subr.mxu0 0.0
      %1686 = vmatpush1.xpose.msra.mxu0 %v1663
      %1687 = vmatprep.subr.mxu0 0.0
      %1688 = vmatpush1.xpose.msra.mxu0 %v1666
      %1689 = vmatprep.subr.mxu0 0.0
      %1690 = vmatpush1.xpose.msra.mxu0 %v1669
      %1691 = vmatprep.subr.mxu0 0.0
      %1692 = vmatpush1.xpose.msra.mxu0 %v1672
      %1693 = vmatprep.subr.mxu0 0.0
      %1694 = vmatpush1.xpose.msra.mxu0 %v1675
      %1695 = vmatprep.subr.mxu0 0.0
      %1696 = vmatpush1.xpose.msra.mxu0 %v1678
      %1697 = vmatprep.subr.mxu0 0.0
      %1698 = vmatpush1.xpose.msra.mxu0 %v1681
      %1699 = vmatprep.subr.mxu0 0.0
      %1700 = vmatpush1.xpose.msra.mxu0 0.0
      %1701 = vmatprep.subr.mxu0 0.0
      %1702 = vmatpush1.xpose.msra.mxu0 0.0
      %1703 = vmatprep.subr.mxu0 0.0
      %1704 = vmatpush1.xpose.msra.mxu0 0.0
      %1705 = vmatprep.subr.mxu0 0.0
      %1706 = vmatpush1.xpose.msra.mxu0 0.0
      %1707 = vmatprep.subr.mxu0 0.0
      %1708 = vmatpush1.xpose.msra.mxu0 0.0
      %1709 = vmatprep.subr.mxu0 0.0
      %1710 = vmatpush1.xpose.msra.mxu0 0.0
      %1711 = vmatprep.subr.mxu0 0.0
      %1712 = vmatpush1.xpose.msra.mxu0 0.0
      %1713 = vmatprep.subr.mxu0 0.0
      %1714 = vmatpush1.xpose.msra.mxu0 0.0
      %1715 = vmatprep.subr.mxu0 0.0
      %1716 = vmatpush1.xpose.msra.mxu0 0.0
      %1717 = vmatprep.subr.mxu0 0.0
      %1718 = vmatpush1.xpose.msra.mxu0 0.0
      %1719 = vmatprep.subr.mxu0 0.0
      %1720 = vmatpush1.xpose.msra.mxu0 0.0
      %1721 = vmatprep.subr.mxu0 0.0
      %1722 = vmatpush1.xpose.msra.mxu0 0.0
      %1723 = vmatprep.subr.mxu0 0.0
      %1724 = vmatpush1.xpose.msra.mxu0 0.0
      %1725 = vmatprep.subr.mxu0 0.0
      %1726 = vmatpush1.xpose.msra.mxu0 0.0
      %1727 = vmatprep.subr.mxu0 0.0
      %1728 = vmatpush1.xpose.msra.mxu0 0.0
      %1729 = vmatprep.subr.mxu0 0.0
      %1730 = vmatpush1.xpose.msra.mxu0 0.0
      %1731 = vmatprep.subr.mxu0 0.0
      %1732 = vmatpush1.xpose.msra.mxu0 0.0
      %1733 = vmatprep.subr.mxu0 0.0
      %1734 = vmatpush1.xpose.msra.mxu0 0.0
      %1735 = vmatprep.subr.mxu0 0.0
      %1736 = vmatpush1.xpose.msra.mxu0 0.0
      %1737 = vmatprep.subr.mxu0 0.0
      %1738 = vmatpush1.xpose.msra.mxu0 0.0
      %1739 = vmatprep.subr.mxu0 0.0
      %1740 = vmatpush1.xpose.msra.mxu0 0.0
      %1741 = vmatprep.subr.mxu0 0.0
      %1742 = vmatpush1.xpose.msra.mxu0 0.0
      %1743 = vmatprep.subr.mxu0 0.0
      %1744 = vmatpush1.xpose.msra.mxu0 0.0
      %1745 = vmatprep.subr.mxu0 0.0
      %1746 = vmatpush1.xpose.msra.mxu0 0.0
      %1747 = vmatprep.mubr.f32.mxu0 0.0
      %1748 = vmatmul.mubr.f32.gmra.mrb[0].mxu0 %v1657
      %v1749 = vpop.f32.mrb[0].mxu0
      %v1750 = vadd.f32 0.0, %v1749
      %v1751 = vpop.f32.mrb[0].mxu0
      %1752 = vdwg.mxu0
      %v1753 = vld [vmem:[#allocation2 + $0x40] sm:$0xff]
      %v1754 = vld [vmem:[#allocation2 + $0x48] sm:$0xff]
      %v1755 = vmul.f32 %v1753, 0.31622776
      %v1756 = vmul.f32 %v1754, 0.31622776
      %v1757 = vld [vmem:[#allocation2 + $0x80] sm:$0xff]
      %v1758 = vld [vmem:[#allocation2 + $0x88] sm:$0xff]
      %v1759 = vld [vmem:[#allocation2 + $0xa8] sm:$0xff]
      %1760 = vxpose.xlu0.b32.start [1/16] %v1755, 128
      %1761 = vxpose.xlu0.b32.cont [2/16] %v1756, 128
      %1762 = vxpose.xlu0.b32.cont [3/16] 0.0, 128
      %1763 = vxpose.xlu0.b32.cont [4/16] 0.0, 128
      %1764 = vxpose.xlu0.b32.cont [5/16] 0.0, 128
      %1765 = vxpose.xlu0.b32.cont [6/16] 0.0, 128
      %1766 = vxpose.xlu0.b32.cont [7/16] 0.0, 128
      %1767 = vxpose.xlu0.b32.cont [8/16] 0.0, 128
      %1768 = vxpose.xlu0.b32.cont [9/16] 0.0, 128
      %1769 = vxpose.xlu0.b32.cont [10/16] 0.0, 128
      %1770 = vxpose.xlu0.b32.cont [11/16] 0.0, 128
      %1771 = vxpose.xlu0.b32.cont [12/16] 0.0, 128
      %1772 = vxpose.xlu0.b32.cont [13/16] 0.0, 128
      %1773 = vxpose.xlu0.b32.cont [14/16] 0.0, 128
      %1774 = vxpose.xlu0.b32.cont [15/16] 0.0, 128
      %1775 = vxpose.xlu0.b32.end [16/16] 0.0, 128
      %v1776 = vpop.trf.xlu0
      %v1777 = vpop.trf.xlu0
      %v1778 = vpop.trf.xlu0
      %v1779 = vpop.trf.xlu0
      %v1780 = vpop.trf.xlu0
      %v1781 = vpop.trf.xlu0
      %v1782 = vpop.trf.xlu0
      %v1783 = vpop.trf.xlu0
      %v1784 = vpop.trf.xlu0
      %v1785 = vpop.trf.xlu0
      %v1786 = vpop.trf.xlu0
      %v1787 = vpop.trf.xlu0
      %v1788 = vpop.trf.xlu0
      %v1789 = vpop.trf.xlu0
      %v1790 = vpop.trf.xlu0
      %v1791 = vpop.trf.xlu0
      %v1793 = vsel %vm732, %v1776, 0
      %v1796 = vsel %vm732, %v1777, 0
      %v1799 = vsel %vm732, %v1778, 0
      %v1802 = vsel %vm732, %v1779, 0
      %v1805 = vsel %vm732, %v1780, 0
      %v1808 = vsel %vm732, %v1781, 0
      %v1811 = vsel %vm732, %v1782, 0
      %v1814 = vsel %vm732, %v1783, 0
      %1816 = vmatprep.subr.mxu0 0.0
      %1817 = vmatpush1.msra.mxu0 %v1757
      %1818 = vmatprep.subr.mxu0 0.0
      %1819 = vmatpush1.msra.mxu0 %v1758
      %1820 = vmatprep.subr.mxu0 0.0
      %1821 = vmatpush1.msra.mxu0 0.0
      %1822 = vmatprep.subr.mxu0 0.0
      %1823 = vmatpush1.msra.mxu0 0.0
      %1824 = vmatprep.subr.mxu0 0.0
      %1825 = vmatpush1.msra.mxu0 0.0
      %1826 = vmatprep.subr.mxu0 0.0
      %1827 = vmatpush1.msra.mxu0 0.0
      %1828 = vmatprep.subr.mxu0 0.0
      %1829 = vmatpush1.msra.mxu0 0.0
      %1830 = vmatprep.subr.mxu0 0.0
      %1831 = vmatpush1.msra.mxu0 0.0
      %1832 = vmatprep.subr.mxu0 0.0
      %1833 = vmatpush1.msra.mxu0 0.0
      %1834 = vmatprep.subr.mxu0 0.0
      %1835 = vmatpush1.msra.mxu0 0.0
      %1836 = vmatprep.subr.mxu0 0.0
      %1837 = vmatpush1.msra.mxu0 0.0
      %1838 = vmatprep.subr.mxu0 0.0
      %1839 = vmatpush1.msra.mxu0 0.0
      %1840 = vmatprep.subr.mxu0 0.0
      %1841 = vmatpush1.msra.mxu0 0.0
      %1842 = vmatprep.subr.mxu0 0.0
      %1843 = vmatpush1.msra.mxu0 0.0
      %1844 = vmatprep.subr.mxu0 0.0
      %1845 = vmatpush1.msra.mxu0 0.0
      %1846 = vmatprep.subr.mxu0 0.0
      %1847 = vmatpush1.msra.mxu0 0.0
      %1848 = vmatprep.subr.mxu0 0.0
      %1849 = vmatpush1.msra.mxu0 0.0
      %1850 = vmatprep.subr.mxu0 0.0
      %1851 = vmatpush1.msra.mxu0 0.0
      %1852 = vmatprep.subr.mxu0 0.0
      %1853 = vmatpush1.msra.mxu0 0.0
      %1854 = vmatprep.subr.mxu0 0.0
      %1855 = vmatpush1.msra.mxu0 0.0
      %1856 = vmatprep.subr.mxu0 0.0
      %1857 = vmatpush1.msra.mxu0 0.0
      %1858 = vmatprep.subr.mxu0 0.0
      %1859 = vmatpush1.msra.mxu0 0.0
      %1860 = vmatprep.subr.mxu0 0.0
      %1861 = vmatpush1.msra.mxu0 0.0
      %1862 = vmatprep.subr.mxu0 0.0
      %1863 = vmatpush1.msra.mxu0 0.0
      %1864 = vmatprep.subr.mxu0 0.0
      %1865 = vmatpush1.msra.mxu0 0.0
      %1866 = vmatprep.subr.mxu0 0.0
      %1867 = vmatpush1.msra.mxu0 0.0
      %1868 = vmatprep.subr.mxu0 0.0
      %1869 = vmatpush1.msra.mxu0 0.0
      %1870 = vmatprep.subr.mxu0 0.0
      %1871 = vmatpush1.msra.mxu0 0.0
      %1872 = vmatprep.subr.mxu0 0.0
      %1873 = vmatpush1.msra.mxu0 0.0
      %1874 = vmatprep.subr.mxu0 0.0
      %1875 = vmatpush1.msra.mxu0 0.0
      %1876 = vmatprep.subr.mxu0 0.0
      %1877 = vmatpush1.msra.mxu0 0.0
      %1878 = vmatprep.subr.mxu0 0.0
      %1879 = vmatpush1.msra.mxu0 0.0
      %1880 = vmatprep.mubr.f32.mxu0 0.0
      %1881 = vmatmul.mubr.f32.gmra.mrb[0].mxu0 %v1793
      %v1882 = vpop.f32.mrb[0].mxu0
      %v1883 = vadd.f32 0.0, %v1882
      %v1884 = vpop.f32.mrb[0].mxu0
      %1885 = vmatprep.mubr.f32.mxu0 0.0
      %1886 = vmatmul.mubr.f32.gmra.mrb[0].mxu0 %v1796
      %v1887 = vpop.f32.mrb[0].mxu0
      %v1888 = vadd.f32 0.0, %v1887
      %v1889 = vpop.f32.mrb[0].mxu0
      %1890 = vmatprep.mubr.f32.mxu0 0.0
      %1891 = vmatmul.mubr.f32.gmra.mrb[0].mxu0 %v1799
      %v1892 = vpop.f32.mrb[0].mxu0
      %v1893 = vadd.f32 0.0, %v1892
      %v1894 = vpop.f32.mrb[0].mxu0
      %1895 = vmatprep.mubr.f32.mxu0 0.0
      %1896 = vmatmul.mubr.f32.gmra.mrb[0].mxu0 %v1802
      %v1897 = vpop.f32.mrb[0].mxu0
      %v1898 = vadd.f32 0.0, %v1897
      %v1899 = vpop.f32.mrb[0].mxu0
      %1900 = vmatprep.mubr.f32.mxu0 0.0
      %1901 = vmatmul.mubr.f32.gmra.mrb[0].mxu0 %v1805
      %v1902 = vpop.f32.mrb[0].mxu0
      %v1903 = vadd.f32 0.0, %v1902
      %v1904 = vpop.f32.mrb[0].mxu0
      %1905 = vmatprep.mubr.f32.mxu0 0.0
      %1906 = vmatmul.mubr.f32.gmra.mrb[0].mxu0 %v1808
      %v1907 = vpop.f32.mrb[0].mxu0
      %v1908 = vadd.f32 0.0, %v1907
      %v1909 = vpop.f32.mrb[0].mxu0
      %1910 = vmatprep.mubr.f32.mxu0 0.0
      %1911 = vmatmul.mubr.f32.gmra.mrb[0].mxu0 %v1811
      %v1912 = vpop.f32.mrb[0].mxu0
      %v1913 = vadd.f32 0.0, %v1912
      %v1914 = vpop.f32.mrb[0].mxu0
      %1915 = vmatprep.mubr.f32.mxu0 0.0
      %1916 = vmatmul.mubr.f32.gmra.mrb[0].mxu0 %v1814
      %v1917 = vpop.f32.mrb[0].mxu0
      %v1918 = vadd.f32 0.0, %v1917
      %v1919 = vpop.f32.mrb[0].mxu0
      %1920 = vdwg.mxu0
      %v1921 = vsel %vm670, %v1883, -inf
      %1922 = vmax.xlane.f32.xlu0 %v1921
      %v1923 = vpop.xlane.xlu0 %1922
      %v1924 = vsel %vm670, %v1888, -inf
      %1925 = vmax.xlane.f32.xlu0 %v1924
      %v1926 = vpop.xlane.xlu0 %1925
      %v1927 = vsel %vm670, %v1893, -inf
      %1928 = vmax.xlane.f32.xlu0 %v1927
      %v1929 = vpop.xlane.xlu0 %1928
      %v1930 = vsel %vm670, %v1898, -inf
      %1931 = vmax.xlane.f32.xlu0 %v1930
      %v1932 = vpop.xlane.xlu0 %1931
      %v1933 = vsel %vm670, %v1903, -inf
      %1934 = vmax.xlane.f32.xlu0 %v1933
      %v1935 = vpop.xlane.xlu0 %1934
      %v1936 = vsel %vm670, %v1908, -inf
      %1937 = vmax.xlane.f32.xlu0 %v1936
      %v1938 = vpop.xlane.xlu0 %1937
      %v1939 = vsel %vm670, %v1913, -inf
      %1940 = vmax.xlane.f32.xlu0 %v1939
      %v1941 = vpop.xlane.xlu0 %1940
      %v1942 = vsel %vm670, %v1918, -inf
      %1943 = vmax.xlane.f32.xlu0 %v1942
      %v1944 = vpop.xlane.xlu0 %1943
      %v1945 = vsub.f32 %v1883, %v1923
      %v1946 = vsub.f32 %v1888, %v1926
      %v1947 = vsub.f32 %v1893, %v1929
      %v1948 = vsub.f32 %v1898, %v1932
      %v1949 = vsub.f32 %v1903, %v1935
      %v1950 = vsub.f32 %v1908, %v1938
      %v1951 = vsub.f32 %v1913, %v1941
      %v1952 = vsub.f32 %v1918, %v1944
      %v1953 = vmul.f32 %v1945, 1.442695
      %v1954 = vpow.pop %v1953
      %v1955 = vmul.f32 %v1946, 1.442695
      %v1956 = vpow.pop %v1955
      %v1957 = vmul.f32 %v1947, 1.442695
      %v1958 = vpow.pop %v1957
      %v1959 = vmul.f32 %v1948, 1.442695
      %v1960 = vpow.pop %v1959
      %v1961 = vmul.f32 %v1949, 1.442695
      %v1962 = vpow.pop %v1961
      %v1963 = vmul.f32 %v1950, 1.442695
      %v1964 = vpow.pop %v1963
      %v1965 = vmul.f32 %v1951, 1.442695
      %v1966 = vpow.pop %v1965
      %v1967 = vmul.f32 %v1952, 1.442695
      %v1968 = vpow.pop %v1967
      %v1969 = vsel %vm670, %v1954, 0.0
      %1970 = vadd.xlane.f32.xlu0 %v1969
      %v1971 = vpop.xlane.xlu0 %1970
      %v1972 = vsel %vm670, %v1956, 0.0
      %1973 = vadd.xlane.f32.xlu0 %v1972
      %v1974 = vpop.xlane.xlu0 %1973
      %v1975 = vsel %vm670, %v1958, 0.0
      %1976 = vadd.xlane.f32.xlu0 %v1975
      %v1977 = vpop.xlane.xlu0 %1976
      %v1978 = vsel %vm670, %v1960, 0.0
      %1979 = vadd.xlane.f32.xlu0 %v1978
      %v1980 = vpop.xlane.xlu0 %1979
      %v1981 = vsel %vm670, %v1962, 0.0
      %1982 = vadd.xlane.f32.xlu0 %v1981
      %v1983 = vpop.xlane.xlu0 %1982
      %v1984 = vsel %vm670, %v1964, 0.0
      %1985 = vadd.xlane.f32.xlu0 %v1984
      %v1986 = vpop.xlane.xlu0 %1985
      %v1987 = vsel %vm670, %v1966, 0.0
      %1988 = vadd.xlane.f32.xlu0 %v1987
      %v1989 = vpop.xlane.xlu0 %1988
      %v1990 = vsel %vm670, %v1968, 0.0
      %1991 = vadd.xlane.f32.xlu0 %v1990
      %v1992 = vpop.xlane.xlu0 %1991
      %v1993 = vrcp.pop %v1971
      %v1994 = vrcp.pop %v1974
      %v1995 = vrcp.pop %v1977
      %v1996 = vrcp.pop %v1980
      %v1997 = vrcp.pop %v1983
      %v1998 = vrcp.pop %v1986
      %v1999 = vrcp.pop %v1989
      %v2000 = vrcp.pop %v1992
      %v2001 = vmul.f32 %v1954, %v1993
      %v2002 = vmul.f32 %v1956, %v1994
      %v2003 = vmul.f32 %v1958, %v1995
      %v2004 = vmul.f32 %v1960, %v1996
      %v2005 = vmul.f32 %v1962, %v1997
      %v2006 = vmul.f32 %v1964, %v1998
      %v2007 = vmul.f32 %v1966, %v1999
      %v2008 = vmul.f32 %v1968, %v2000
      %v2010 = vsel %vm670, %v1759, 0
      %v2013 = vsel %vm670, %v2001, 0
      %v2016 = vsel %vm670, %v2002, 0
      %v2019 = vsel %vm670, %v2003, 0
      %v2022 = vsel %vm670, %v2004, 0
      %v2025 = vsel %vm670, %v2005, 0
      %v2028 = vsel %vm670, %v2006, 0
      %v2031 = vsel %vm670, %v2007, 0
      %v2034 = vsel %vm670, %v2008, 0
      %2036 = vmatprep.subr.mxu0 0.0
      %2037 = vmatpush1.xpose.msra.mxu0 %v2013
      %2038 = vmatprep.subr.mxu0 0.0
      %2039 = vmatpush1.xpose.msra.mxu0 %v2016
      %2040 = vmatprep.subr.mxu0 0.0
      %2041 = vmatpush1.xpose.msra.mxu0 %v2019
      %2042 = vmatprep.subr.mxu0 0.0
      %2043 = vmatpush1.xpose.msra.mxu0 %v2022
      %2044 = vmatprep.subr.mxu0 0.0
      %2045 = vmatpush1.xpose.msra.mxu0 %v2025
      %2046 = vmatprep.subr.mxu0 0.0
      %2047 = vmatpush1.xpose.msra.mxu0 %v2028
      %2048 = vmatprep.subr.mxu0 0.0
      %2049 = vmatpush1.xpose.msra.mxu0 %v2031
      %2050 = vmatprep.subr.mxu0 0.0
      %2051 = vmatpush1.xpose.msra.mxu0 %v2034
      %2052 = vmatprep.subr.mxu0 0.0
      %2053 = vmatpush1.xpose.msra.mxu0 0.0
      %2054 = vmatprep.subr.mxu0 0.0
      %2055 = vmatpush1.xpose.msra.mxu0 0.0
      %2056 = vmatprep.subr.mxu0 0.0
      %2057 = vmatpush1.xpose.msra.mxu0 0.0
      %2058 = vmatprep.subr.mxu0 0.0
      %2059 = vmatpush1.xpose.msra.mxu0 0.0
      %2060 = vmatprep.subr.mxu0 0.0
      %2061 = vmatpush1.xpose.msra.mxu0 0.0
      %2062 = vmatprep.subr.mxu0 0.0
      %2063 = vmatpush1.xpose.msra.mxu0 0.0
      %2064 = vmatprep.subr.mxu0 0.0
      %2065 = vmatpush1.xpose.msra.mxu0 0.0
      %2066 = vmatprep.subr.mxu0 0.0
      %2067 = vmatpush1.xpose.msra.mxu0 0.0
      %2068 = vmatprep.subr.mxu0 0.0
      %2069 = vmatpush1.xpose.msra.mxu0 0.0
      %2070 = vmatprep.subr.mxu0 0.0
      %2071 = vmatpush1.xpose.msra.mxu0 0.0
      %2072 = vmatprep.subr.mxu0 0.0
      %2073 = vmatpush1.xpose.msra.mxu0 0.0
      %2074 = vmatprep.subr.mxu0 0.0
      %2075 = vmatpush1.xpose.msra.mxu0 0.0
      %2076 = vmatprep.subr.mxu0 0.0
      %2077 = vmatpush1.xpose.msra.mxu0 0.0
      %2078 = vmatprep.subr.mxu0 0.0
      %2079 = vmatpush1.xpose.msra.mxu0 0.0
      %2080 = vmatprep.subr.mxu0 0.0
      %2081 = vmatpush1.xpose.msra.mxu0 0.0
      %2082 = vmatprep.subr.mxu0 0.0
      %2083 = vmatpush1.xpose.msra.mxu0 0.0
      %2084 = vmatprep.subr.mxu0 0.0
      %2085 = vmatpush1.xpose.msra.mxu0 0.0
      %2086 = vmatprep.subr.mxu0 0.0
      %2087 = vmatpush1.xpose.msra.mxu0 0.0
      %2088 = vmatprep.subr.mxu0 0.0
      %2089 = vmatpush1.xpose.msra.mxu0 0.0
      %2090 = vmatprep.subr.mxu0 0.0
      %2091 = vmatpush1.xpose.msra.mxu0 0.0
      %2092 = vmatprep.subr.mxu0 0.0
      %2093 = vmatpush1.xpose.msra.mxu0 0.0
      %2094 = vmatprep.subr.mxu0 0.0
      %2095 = vmatpush1.xpose.msra.mxu0 0.0
      %2096 = vmatprep.subr.mxu0 0.0
      %2097 = vmatpush1.xpose.msra.mxu0 0.0
      %2098 = vmatprep.subr.mxu0 0.0
      %2099 = vmatpush1.xpose.msra.mxu0 0.0
      %2100 = vmatprep.mubr.f32.mxu0 0.0
      %2101 = vmatmul.mubr.f32.gmra.mrb[0].mxu0 %v2010
      %v2102 = vpop.f32.mrb[0].mxu0
      %v2103 = vadd.f32 0.0, %v2102
      %v2104 = vpop.f32.mrb[0].mxu0
      %2105 = vdwg.mxu0
      %v2107 = vrot.slane %v1397, 7
      %v2110 = vrot.slane %v1750, 6
      %v2113 = vrot.slane %v2103, 5
      %vm2115 = vcmask 1040384
      %v2116 = vsel %vm2115, %v1044, %v2107
      %vm2117 = vcmask 1041408
      %v2118 = vsel %vm2117, %v2116, %v2110
      %vm2119 = vcmask 1042432
      %v2120 = vsel %vm2119, %v2118, %v2113
      %v2121 = vld [vmem:[%s3] sm:$0xf]
      %v2122 = vld [vmem:[%s4] sm:$0xf]
      %2124 = vset.pattern.permute.xlu0 0
      %2125 = vperm.xlu0 %2124, %v2122
      %v2126 = vpop.permute.xlu0 %2125
      %vm2128 = vcmask 31744
      %v2130 = vsel %vm2128, %v2121, 0
      %v2133 = vsel %vm491, %v2120, 0
      %2135 = vmatprep.subr.mxu0 0.0
      %2136 = vmatpush1.msra.mxu0 %v2133
      %2137 = vmatprep.subr.mxu0 0.0
      %2138 = vmatpush1.msra.mxu0 0.0
      %2139 = vmatprep.subr.mxu0 0.0
      %2140 = vmatpush1.msra.mxu0 0.0
      %2141 = vmatprep.subr.mxu0 0.0
      %2142 = vmatpush1.msra.mxu0 0.0
      %2143 = vmatprep.subr.mxu0 0.0
      %2144 = vmatpush1.msra.mxu0 0.0
      %2145 = vmatprep.subr.mxu0 0.0
      %2146 = vmatpush1.msra.mxu0 0.0
      %2147 = vmatprep.subr.mxu0 0.0
      %2148 = vmatpush1.msra.mxu0 0.0
      %2149 = vmatprep.subr.mxu0 0.0
      %2150 = vmatpush1.msra.mxu0 0.0
      %2151 = vmatprep.subr.mxu0 0.0
      %2152 = vmatpush1.msra.mxu0 0.0
      %2153 = vmatprep.subr.mxu0 0.0
      %2154 = vmatpush1.msra.mxu0 0.0
      %2155 = vmatprep.subr.mxu0 0.0
      %2156 = vmatpush1.msra.mxu0 0.0
      %2157 = vmatprep.subr.mxu0 0.0
      %2158 = vmatpush1.msra.mxu0 0.0
      %2159 = vmatprep.subr.mxu0 0.0
      %2160 = vmatpush1.msra.mxu0 0.0
      %2161 = vmatprep.subr.mxu0 0.0
      %2162 = vmatpush1.msra.mxu0 0.0
      %2163 = vmatprep.subr.mxu0 0.0
      %2164 = vmatpush1.msra.mxu0 0.0
      %2165 = vmatprep.subr.mxu0 0.0
      %2166 = vmatpush1.msra.mxu0 0.0
      %2167 = vmatprep.subr.mxu0 0.0
      %2168 = vmatpush1.msra.mxu0 0.0
      %2169 = vmatprep.subr.mxu0 0.0
      %2170 = vmatpush1.msra.mxu0 0.0
      %2171 = vmatprep.subr.mxu0 0.0
      %2172 = vmatpush1.msra.mxu0 0.0
      %2173 = vmatprep.subr.mxu0 0.0
      %2174 = vmatpush1.msra.mxu0 0.0
      %2175 = vmatprep.subr.mxu0 0.0
      %2176 = vmatpush1.msra.mxu0 0.0
      %2177 = vmatprep.subr.mxu0 0.0
      %2178 = vmatpush1.msra.mxu0 0.0
      %2179 = vmatprep.subr.mxu0 0.0
      %2180 = vmatpush1.msra.mxu0 0.0
      %2181 = vmatprep.subr.mxu0 0.0
      %2182 = vmatpush1.msra.mxu0 0.0
      %2183 = vmatprep.subr.mxu0 0.0
      %2184 = vmatpush1.msra.mxu0 0.0
      %2185 = vmatprep.subr.mxu0 0.0
      %2186 = vmatpush1.msra.mxu0 0.0
      %2187 = vmatprep.subr.mxu0 0.0
      %2188 = vmatpush1.msra.mxu0 0.0
      %2189 = vmatprep.subr.mxu0 0.0
      %2190 = vmatpush1.msra.mxu0 0.0
      %2191 = vmatprep.subr.mxu0 0.0
      %2192 = vmatpush1.msra.mxu0 0.0
      %2193 = vmatprep.subr.mxu0 0.0
      %2194 = vmatpush1.msra.mxu0 0.0
      %2195 = vmatprep.subr.mxu0 0.0
      %2196 = vmatpush1.msra.mxu0 0.0
      %2197 = vmatprep.subr.mxu0 0.0
      %2198 = vmatpush1.msra.mxu0 0.0
      %2199 = vmatprep.mubr.f32.mxu0 0.0
      %2200 = vmatmul.mubr.f32.gmra.mrb[0].mxu0 %v2130
      %v2201 = vpop.f32.mrb[0].mxu0
      %v2202 = vadd.f32 %v2126, %v2201
      %v2203 = vpop.f32.mrb[0].mxu0
      %2204 = vdwg.mxu0
      %v2205 = vld [vmem:[#allocation2] sm:$0xff]
      %v2206 = vld [vmem:[#allocation2 + $0x8] sm:$0xff]
      %2207 = vst.msk [vmem:[%s224] sm:$0xff] %vm670, %v2205
      %2208 = vst.msk [vmem:[%s224 + $0x8] sm:$0xff] %vm670, %v2206
      %vm2209 = vcmask 519168
      %2210 = vst.msk [vmem:[%s224 + $0x10] sm:$0xf] %vm2209, %v2202
      %p2211 = scmp.lt.s32.totalorder %s16, 1
      %s2212 = scalar_select %p2211, %s16, 1
      %s2213 = smul.addr %s2212, 3
      %s2214 = smul.addr %s2213, 8
      %s2215 = scalar_lea.vmem %s5, %s2214
      // Predicated region
      $region41: #{spatial_attention_forward.1} parent=39 // pred_check
        %p2216 = pneg %p144
      $region42: #{spatial_attention_forward.1} parent=39 // pred_check_branch
        %2218 = sbr.rel (%p2216) target = $region44
      $region43: #{spatial_attention_forward.1} parent=39 // pred_region
        _
      $region44: #{spatial_attention_forward.1} parent=39 // pred_fallthru
        _
    $region40: #{spatial_attention_forward.1} parent=5 // pred_fallthru
      _
    %p2219 = scmp.le.s32.totalorder 2, %s11
    // Predicated region
    $region45: #{spatial_attention_forward.1} parent=5 // pred_check
      %p2220 = pneg %p2219
    $region46: #{spatial_attention_forward.1} parent=5 // pred_check_branch
      %2222 = sbr.rel (%p2220) target = $region48
    $region47: #{spatial_attention_forward.1} parent=5 // pred_region
      %s2223 = ssub.s32 %s11, 2
      // Predicated region
      $region49: #{spatial_attention_forward.1} parent=47 // pred_check
        %p2224 = pneg %p150
      $region50: #{spatial_attention_forward.1} parent=47 // pred_check_branch
        %2226 = sbr.rel (%p2224) target = $region52
      $region51: #{spatial_attention_forward.1} parent=47 // pred_region
        %p2227 = scmp.lt.s32.totalorder %s17, 1
        %s2228 = scalar_select %p2227, %s17, 1
        %s2229 = smul.addr %s2228, 3
        %s2230 = smul.addr %s2229, 8
        %s2231 = scalar_lea.vmem %s5, %s2230
      $region52: #{spatial_attention_forward.1} parent=47 // pred_fallthru
        _
    $region48: #{spatial_attention_forward.1} parent=5 // pred_fallthru
      _
  $region6: #{spatial_attention_forward.1} parent=0 // loop_footer
    %s15 = sadd.s32 1, %s11
  $region7: #{spatial_attention_forward.1} parent=0 // loop_footer_branch
    %10 = sbr.rel target = $region3
  $region8: #{spatial_attention_forward.1} parent=0 // loop_exit
    _

</llo_original>
